<compile_context>
chip_gen: v7x
topology: tpu7x:2x2x1
jax: 0.10.0
libtpu: 0.0.40
codegen_flags: <defaults>
</compile_context>

<pallas_src>
import jax
import jax.numpy as jnp
from jax.experimental import pallas as pl
from jax.experimental.pallas import tpu as pltpu


def add_conv1x1_kernel(a_ref, b_ref, w_ref, o_ref):
    # a_ref, b_ref: (Cin, HW) f32     w_ref: (1, Cin, Ct) bf16     o_ref: (1, Ct, HW) f32
    x = a_ref[...] + b_ref[...]                       # VPU add, f32, (Cin, HW)
    xt = x.T.astype(w_ref.dtype)                      # XLU transpose -> (HW, Cin), cast bf16
    acc = jnp.dot(xt, w_ref[0],                       # MXU: (HW, Cin) @ (Cin, Ct)
                  preferred_element_type=jnp.float32)  # -> (HW, Ct) f32
    o_ref[0] = acc.T                                  # XLU transpose -> (Ct, HW), NCHW-major


def make_add_conv1x1(weight_oihw, *, weight_dtype=jnp.bfloat16):
    """Build jitted fused add + 1x1 conv (bias=False) for NCHW, N == 1 inputs."""
    Cout, Cin, kh, kw = weight_oihw.shape
    assert kh == 1 and kw == 1, "kernel only implements 1x1 convolution"

    # Cout split: 2 tiles (megacore / pipeline) if it divides evenly, else 1.
    n_tiles = 2 if Cout % 2 == 0 else 1
    ct = Cout // n_tiles

    # One-time weight re-layout (done at init, jit constant-folds it):
    #   OIHW -> (Cout, Cin) -> (Cin, Cout) -> (n_tiles, Cin, Ct), cast to bf16.
    w3d = (jnp.asarray(weight_oihw)
           .reshape(Cout, Cin).T
           .reshape(Cin, n_tiles, ct)
           .transpose(1, 0, 2)
           .astype(weight_dtype))                      # (n_tiles, Cin, Ct)

    @jax.jit
    def fwd(a_nchw, b_nchw):
        N, C, H, W = a_nchw.shape
        assert N == 1, "kernel supports N == 1 only"
        assert C == Cin and b_nchw.shape == a_nchw.shape, "channel/shape mismatch"
        HW = H * W
        a2d = a_nchw.reshape(Cin, HW)                  # pure view (no transpose)
        b2d = b_nchw.reshape(Cin, HW)                  # pure view (no transpose)

        cost = pl.CostEstimate(
            flops=2 * Cout * Cin * HW,
            transcendentals=0,
            bytes_accessed=(2 * Cin * HW * 4           # a + b (f32)
                            + Cout * Cin * 2           # weight (bf16)
                            + Cout * HW * 4),          # output (f32)
        )

        out3d = pl.pallas_call(
            add_conv1x1_kernel,
            out_shape=jax.ShapeDtypeStruct((n_tiles, ct, HW), jnp.float32),
            grid=(n_tiles,),
            in_specs=[
                pl.BlockSpec((Cin, HW), lambda i: (0, 0)),
                pl.BlockSpec((Cin, HW), lambda i: (0, 0)),
                pl.BlockSpec((1, Cin, ct), lambda i: (i, 0, 0)),
            ],
            out_specs=pl.BlockSpec((1, ct, HW), lambda i: (i, 0, 0)),
            compiler_params=pltpu.CompilerParams(
                dimension_semantics=("parallel",)),
            cost_estimate=cost,
        )(a2d, b2d, w3d)

        # (n_tiles, Ct, HW) is channel-major contiguous -> pure view back to NCHW.
        return out3d.reshape(N, Cout, H, W)

    return fwd


if __name__ == "__main__":
    key = jax.random.PRNGKey(0)
    k1, k2, k3 = jax.random.split(key, 3)

    N, Cin, H, W = 1, 272, 7, 7
    Cout = 1632

    x442 = jax.random.normal(k1, (N, Cin, H, W), dtype=jnp.float32)
    x428 = jax.random.normal(k2, (N, Cin, H, W), dtype=jnp.float32)
    # Deterministic Conv2d weight (Cout, Cin, 1, 1), kaiming-ish scale.
    weight = jax.random.normal(k3, (Cout, Cin, 1, 1), dtype=jnp.float32) * (Cin ** -0.5)

    fwd = make_add_conv1x1(weight)          # weight re-layout + bf16 cast hoisted to init
    out = jax.block_until_ready(fwd(x442, x428))

    # Reference 1: bf16-consistent matmul (tight tolerance).
    ref_bf16 = jnp.dot(
        weight.reshape(Cout, Cin).astype(jnp.bfloat16),
        (x442 + x428).reshape(Cin, H * W).astype(jnp.bfloat16),
        preferred_element_type=jnp.float32,
    ).reshape(N, Cout, H, W)

    # Reference 2: exact module semantics in f32 (looser tolerance: kernel uses a
    # bf16 matmul with f32 accumulation).
    ref_f32 = jax.lax.conv_general_dilated(
        x442 + x428, weight,
        window_strides=(1, 1), padding="VALID",
        dimension_numbers=("NCHW", "OIHW", "NCHW"),
    )

    assert out.shape == (N, Cout, H, W)
    assert out.dtype == jnp.float32
    assert jnp.allclose(out, ref_bf16, atol=1e-2, rtol=1e-2)
    assert jnp.allclose(out, ref_f32, atol=6e-2, rtol=6e-2)

    print("KERNEL_OK")
</pallas_src>

<mosaic_0001>
module attributes {stable_mosaic.version = 11 : i64} {
  func.func @add_conv1x1_kernel(%arg0: i32, %arg1: memref<272x49xf32, #tpu.memory_space<vmem>>, %arg2: memref<272x49xf32, #tpu.memory_space<vmem>>, %arg3: memref<1x272x816xbf16, #tpu.memory_space<vmem>>, %arg4: memref<1x816x49xf32, #tpu.memory_space<vmem>>) attributes {dimension_semantics = [#tpu.dimension_semantics<parallel>], iteration_bounds = array<i64: 2>, scalar_prefetch = 0 : i64, scratch_operands = 0 : i64, tpu.core_type = #tpu.core_type<tc>, window_params = [{pipeline_mode = #tpu.pipeline_mode<synchronous>, transform_indices = @transform_0, window_bounds = array<i64: 272, 49>}, {pipeline_mode = #tpu.pipeline_mode<synchronous>, transform_indices = @transform_1, window_bounds = array<i64: 272, 49>}, {transform_indices = @transform_2, window_bounds = array<i64: 1, 272, 816>}, {transform_indices = @transform_3, window_bounds = array<i64: 1, 816, 49>}]} {
    %c0 = arith.constant 0 : index
    %c0_0 = arith.constant 0 : index
    %0 = vector.load %arg1[%c0, %c0_0] : memref<272x49xf32, #tpu.memory_space<vmem>>, vector<272x49xf32>
    %c0_1 = arith.constant 0 : index
    %c0_2 = arith.constant 0 : index
    %1 = vector.load %arg2[%c0_1, %c0_2] : memref<272x49xf32, #tpu.memory_space<vmem>>, vector<272x49xf32>
    %2 = arith.addf %0, %1 : vector<272x49xf32>
    %3 = tpu.transpose %2, [1, 0] : vector<272x49xf32> -> vector<49x272xf32>
    %4 = arith.truncf %3 : vector<49x272xf32> to vector<49x272xbf16>
    %c0_3 = arith.constant 0 : index
    %c0_4 = arith.constant 0 : index
    %c0_5 = arith.constant 0 : index
    %5 = vector.load %arg3[%c0_3, %c0_4, %c0_5] : memref<1x272x816xbf16, #tpu.memory_space<vmem>>, vector<1x272x816xbf16>
    %6 = vector.shape_cast %5 : vector<1x272x816xbf16> to vector<272x816xbf16>
    %cst = arith.constant dense<0.000000e+00> : vector<49x816xf32>
    %7 = tpu.matmul %4, %6, %cst {dimension_numbers = #tpu.dot_dimension_numbers<[1], [0], [0], [1], [0, 0, 1, 1], [], []>} : vector<49x272xbf16>, vector<272x816xbf16>, vector<49x816xf32> -> vector<49x816xf32>
    %8 = tpu.transpose %7, [1, 0] : vector<49x816xf32> -> vector<816x49xf32>
    %c0_6 = arith.constant 0 : index
    %c0_7 = arith.constant 0 : index
    %c0_8 = arith.constant 0 : index
    %9 = vector.load %arg4[%c0_6, %c0_7, %c0_8] : memref<1x816x49xf32, #tpu.memory_space<vmem>>, vector<1x816x49xf32>
    %10 = vector.shape_cast %9 : vector<1x816x49xf32> to vector<816x49xf32>
    %11 = vector.shape_cast %8 : vector<816x49xf32> to vector<1x816x49xf32>
    tpu.vector_store %arg4[%c0_6, %c0_7, %c0_8], %11 {strides = array<i32>} : memref<1x816x49xf32, #tpu.memory_space<vmem>>, vector<1x816x49xf32>,
    return
  }
  func.func @transform_0(%arg0: i32) -> (i32, i32) {
    %c0_i32 = arith.constant 0 : i32
    %c0_i32_0 = arith.constant 0 : i32
    %c0_i32_1 = arith.constant 0 : i32
    return %c0_i32, %c0_i32_0 : i32, i32
  }
  func.func @transform_1(%arg0: i32) -> (i32, i32) {
    %c0_i32 = arith.constant 0 : i32
    %c0_i32_0 = arith.constant 0 : i32
    %c0_i32_1 = arith.constant 0 : i32
    return %c0_i32, %c0_i32_0 : i32, i32
  }
  func.func @transform_2(%arg0: i32) -> (i32, i32, i32) {
    %c0_i32 = arith.constant 0 : i32
    %c0_i32_0 = arith.constant 0 : i32
    %c0_i32_1 = arith.constant 0 : i32
    return %arg0, %c0_i32, %c0_i32_0 : i32, i32, i32
  }
  func.func @transform_3(%arg0: i32) -> (i32, i32, i32) {
    %c0_i32 = arith.constant 0 : i32
    %c0_i32_0 = arith.constant 0 : i32
    %c0_i32_1 = arith.constant 0 : i32
    return %arg0, %c0_i32, %c0_i32_0 : i32, i32, i32
  }
}

</mosaic_0001>

<llo_original>
// kernel: fwd.1
$region0: #{fwd.1}
  #allocation0 [shape = 'u32[]', space=smem, size = 0x4, offset = 0x4, fixed_abs, tag = 'smem constant byte address 0x4 - core index']
  #allocation1 [shape = 'u32[144,128]{1,0:T(1,128)}', space=vmem, size = 0x12000, scoped, tag = 'internal scratch']
  %s0 = inlined_call_operand.vmem [shape: f32[272,49], index: 0, kind: input, shape index: {}]
  %s1 = inlined_call_operand.vmem [shape: f32[272,49], index: 1, kind: input, shape index: {}]
  %s2 = inlined_call_operand.vmem [shape: bf16[2,272,816], index: 2, kind: input, shape index: {}]
  %s3 = inlined_call_operand.vmem [shape: f32[2,816,49], index: 3, kind: output, shape index: {}]
  %s4 = sld [smem:[#allocation0]]
  $region45: #{fwd.1} parent=0
    _
  %s6 = ssub.s32 1, %s4
  %s7 = scalar_select 0, %s6, %s4
  loop: start=0, step=1, limit=4
  $region2: #{fwd.1} parent=0 // loop_pre_header
    _
  $region3: #{fwd.1} parent=0 // loop_header
    %s9 = sphi 0, %s13
    %p10 = scmp.ge.s32.totalorder %s9, 4
    %s17 = sphi 0, %s17
    %s19 = sphi 0, %s17
    %s20 = sphi 0, %s19
    %s34 = sphi 0, %s20
    %s38 = sphi 0, %s38
    %s40 = sphi 0, %s38
    %s41 = sphi 0, %s40
    %s55 = sphi 0, %s41
    %s61 = sphi 0, %s63
    %s64 = sphi 0, %s61
    %s65 = sphi 0, %s64
    %s81 = sphi 0, %s65
    %s87 = sphi 0, %s89
    %s90 = sphi 0, %s87
    %s91 = sphi 0, %s90
    %s107 = sphi 0, %s91
  $region4: #{fwd.1} parent=0 // loop_header_branch
    %12 = sbr.rel (%p10) target = $region8
  $region5: #{fwd.1} parent=0 // loop_body
    %s14 = ssub.s32 %s9, 1
    %s15 = ssub.s32 %s9, 2
    %s16 = sadd.s32 %s9, 1
    %s18 = sadd.s32 %s17, 1
    %p21 = scmp.eq.s32.totalorder %s9, 1
    %p22 = scmp.ne.s32.totalorder %s17, %s19
    %p23 = scmp.eq.s32.totalorder %s9, 0
    %p24 = por %p22, %p23
    %p25 = scmp.ne.s32.totalorder %s17, %s19
    %p26 = scmp.eq.s32.totalorder %s14, 1
    %p27 = por %p25, %p26
    %p28 = scmp.ne.s32.totalorder %s19, %s20
    %p29 = scmp.eq.s32.totalorder %s14, 0
    %p30 = por %p28, %p29
    %p31 = scmp.ne.s32.totalorder %s19, %s20
    %p32 = scmp.eq.s32.totalorder %s15, 1
    %p33 = por %p31, %p32
    %p35 = scmp.ne.s32.totalorder %s20, %s34
    %p36 = scmp.eq.s32.totalorder %s15, 0
    %p37 = por %p35, %p36
    %s39 = sadd.s32 %s38, 1
    %p42 = scmp.eq.s32.totalorder %s9, 1
    %p43 = scmp.ne.s32.totalorder %s38, %s40
    %p44 = scmp.eq.s32.totalorder %s9, 0
    %p45 = por %p43, %p44
    %p46 = scmp.ne.s32.totalorder %s38, %s40
    %p47 = scmp.eq.s32.totalorder %s14, 1
    %p48 = por %p46, %p47
    %p49 = scmp.ne.s32.totalorder %s40, %s41
    %p50 = scmp.eq.s32.totalorder %s14, 0
    %p51 = por %p49, %p50
    %p52 = scmp.ne.s32.totalorder %s40, %s41
    %p53 = scmp.eq.s32.totalorder %s15, 1
    %p54 = por %p52, %p53
    %p56 = scmp.ne.s32.totalorder %s41, %s55
    %p57 = scmp.eq.s32.totalorder %s15, 0
    %p58 = por %p56, %p57
    %s59 = ssub.s32 %s9, %s16
    %p60 = scmp.eq.s32.totalorder %s59, 0
    %s62 = sadd.s32 %s61, 1
    %s63 = scalar_select %p60, %s61, %s62
    %p66 = pneg %p60
    %p67 = scmp.eq.s32.totalorder %s9, 1
    %p68 = por %p66, %p67
    %p69 = scmp.ne.s32.totalorder %s61, %s64
    %p70 = scmp.eq.s32.totalorder %s9, 0
    %p71 = por %p69, %p70
    %p72 = scmp.ne.s32.totalorder %s61, %s64
    %p73 = scmp.eq.s32.totalorder %s14, 1
    %p74 = por %p72, %p73
    %p75 = scmp.ne.s32.totalorder %s64, %s65
    %p76 = scmp.eq.s32.totalorder %s14, 0
    %p77 = por %p75, %p76
    %p78 = scmp.ne.s32.totalorder %s64, %s65
    %p79 = scmp.eq.s32.totalorder %s15, 1
    %p80 = por %p78, %p79
    %p82 = scmp.ne.s32.totalorder %s65, %s81
    %p83 = scmp.eq.s32.totalorder %s15, 0
    %p84 = por %p82, %p83
    %s85 = ssub.s32 %s9, %s16
    %p86 = scmp.eq.s32.totalorder %s85, 0
    %s88 = sadd.s32 %s87, 1
    %s89 = scalar_select %p86, %s87, %s88
    %p92 = pneg %p86
    %p93 = scmp.eq.s32.totalorder %s9, 1
    %p94 = por %p92, %p93
    %p95 = scmp.ne.s32.totalorder %s87, %s90
    %p96 = scmp.eq.s32.totalorder %s9, 0
    %p97 = por %p95, %p96
    %p98 = scmp.ne.s32.totalorder %s87, %s90
    %p99 = scmp.eq.s32.totalorder %s14, 1
    %p100 = por %p98, %p99
    %p101 = scmp.ne.s32.totalorder %s90, %s91
    %p102 = scmp.eq.s32.totalorder %s14, 0
    %p103 = por %p101, %p102
    %p104 = scmp.ne.s32.totalorder %s90, %s91
    %p105 = scmp.eq.s32.totalorder %s15, 1
    %p106 = por %p104, %p105
    %p108 = scmp.ne.s32.totalorder %s91, %s107
    %p109 = scmp.eq.s32.totalorder %s15, 0
    %p110 = por %p108, %p109
    %p111 = scmp.le.s32.totalorder 1, %s9
    %p112 = scmp.lt.s32.totalorder %s9, 3
    %p113 = pnand %p111, %p112
    %p114 = pneg %p113
    // Predicated region
    $region9: #{fwd.1} parent=5 // pred_check
      _
    $region10: #{fwd.1} parent=5 // pred_check_branch
      %116 = sbr.rel (%p113) target = $region12
    $region11: #{fwd.1} parent=5 // pred_region
      %s117 = ssub.s32 %s9, 1
      // Predicated region
      $region13: #{fwd.1} parent=11 // pred_check
        %p118 = pneg %p30
      $region14: #{fwd.1} parent=11 // pred_check_branch
        %120 = sbr.rel (%p118) target = $region16
      $region15: #{fwd.1} parent=11 // pred_region
        _
      $region16: #{fwd.1} parent=11 // pred_fallthru
        _
      // Predicated region
      $region17: #{fwd.1} parent=11 // pred_check
        %p121 = pneg %p51
      $region18: #{fwd.1} parent=11 // pred_check_branch
        %123 = sbr.rel (%p121) target = $region20
      $region19: #{fwd.1} parent=11 // pred_region
        _
      $region20: #{fwd.1} parent=11 // pred_fallthru
        _
    $region12: #{fwd.1} parent=5 // pred_fallthru
      _
    %p124 = scmp.lt.s32.totalorder %s9, 2
    // Predicated region
    $region21: #{fwd.1} parent=5 // pred_check
      %p125 = pneg %p124
    $region22: #{fwd.1} parent=5 // pred_check_branch
      %127 = sbr.rel (%p125) target = $region24
    $region23: #{fwd.1} parent=5 // pred_region
      // Predicated region
      $region25: #{fwd.1} parent=23 // pred_check
        %p128 = pneg %p71
      $region26: #{fwd.1} parent=23 // pred_check_branch
        %130 = sbr.rel (%p128) target = $region28
      $region27: #{fwd.1} parent=23 // pred_region
        %p131 = scmp.lt.s32.totalorder %s9, 1
        %s132 = scalar_select %p131, %s9, 1
        %s133 = smul.addr %s132, 238
        %s134 = smul.addr %s133, 4
        %s135 = scalar_lea.vmem %s2, %s134
      $region28: #{fwd.1} parent=23 // pred_fallthru
        _
    $region24: #{fwd.1} parent=5 // pred_fallthru
      _
    %p136 = scmp.le.s32.totalorder 1, %s9
    %p137 = scmp.lt.s32.totalorder %s9, 3
    %p138 = pnand %p136, %p137
    %p139 = pneg %p138
    // Predicated region
    $region29: #{fwd.1} parent=5 // pred_check
      _
    $region30: #{fwd.1} parent=5 // pred_check_branch
      %141 = sbr.rel (%p138) target = $region32
    $region31: #{fwd.1} parent=5 // pred_region
      %s142 = ssub.s32 %s9, 1
      %p143 = pneg %p30
      %p144 = pneg %p27
      %p145 = pneg %p51
      %p146 = pneg %p48
      %p147 = scmp.lt.s32.totalorder %s14, 1
      %s148 = scalar_select %p147, %s14, 1
      %s149 = smul.addr %s148, 238
      %s150 = smul.addr %s149, 4
      %s151 = scalar_lea.vmem %s2, %s150
      %p152 = pneg %p77
      %p153 = pneg %p74
      %p154 = pneg %p103
      %p155 = pneg %p100
      %p156 = scmp.lt.s32.totalorder %s14, 1
      %s157 = scalar_select %p156, %s14, 1
      %s158 = smul.addr %s157, 102
      %s159 = smul.addr %s158, 8
      %s160 = scalar_lea.vmem %s3, %s159
      %p161 = scmp.lt.s32.totalorder %s14, 1
      %s162 = scalar_select %p161, %s14, 1
      %s163 = smul.addr %s162, 238
      %s164 = smul.addr %s163, 4
      %s165 = scalar_lea.vmem %s2, %s164
      %p166 = scmp.lt.s32.totalorder %s14, 1
      %s167 = scalar_select %p166, %s14, 1
      %s168 = smul.addr %s167, 102
      %s169 = smul.addr %s168, 8
      %s170 = scalar_lea.vmem %s3, %s169
      %v172 = vld [vmem:[%s0] sm:$0xff]
      %v173 = vld [vmem:[%s0 + $0x8] sm:$0xff]
      %v174 = vld [vmem:[%s0 + $0x10] sm:$0xff]
      %v175 = vld [vmem:[%s0 + $0x18] sm:$0xff]
      %v176 = vld [vmem:[%s0 + $0x20] sm:$0xff]
      %v177 = vld [vmem:[%s0 + $0x28] sm:$0xff]
      %v178 = vld [vmem:[%s0 + $0x30] sm:$0xff]
      %v179 = vld [vmem:[%s0 + $0x38] sm:$0xff]
      %v180 = vld [vmem:[%s0 + $0x40] sm:$0xff]
      %v181 = vld [vmem:[%s0 + $0x48] sm:$0xff]
      %v182 = vld [vmem:[%s0 + $0x50] sm:$0xff]
      %v183 = vld [vmem:[%s0 + $0x58] sm:$0xff]
      %v184 = vld [vmem:[%s0 + $0x60] sm:$0xff]
      %v185 = vld [vmem:[%s0 + $0x68] sm:$0xff]
      %v186 = vld [vmem:[%s0 + $0x70] sm:$0xff]
      %v187 = vld [vmem:[%s0 + $0x78] sm:$0xff]
      %v188 = vld [vmem:[%s0 + $0x80] sm:$0xff]
      %v189 = vld [vmem:[%s0 + $0x88] sm:$0xff]
      %v190 = vld [vmem:[%s0 + $0x90] sm:$0xff]
      %v191 = vld [vmem:[%s0 + $0x98] sm:$0xff]
      %v192 = vld [vmem:[%s0 + $0xa0] sm:$0xff]
      %v193 = vld [vmem:[%s0 + $0xa8] sm:$0xff]
      %v194 = vld [vmem:[%s0 + $0xb0] sm:$0xff]
      %v195 = vld [vmem:[%s0 + $0xb8] sm:$0xff]
      %v196 = vld [vmem:[%s0 + $0xc0] sm:$0xff]
      %v197 = vld [vmem:[%s0 + $0xc8] sm:$0xff]
      %v198 = vld [vmem:[%s0 + $0xd0] sm:$0xff]
      %v199 = vld [vmem:[%s0 + $0xd8] sm:$0xff]
      %v200 = vld [vmem:[%s0 + $0xe0] sm:$0xff]
      %v201 = vld [vmem:[%s0 + $0xe8] sm:$0xff]
      %v202 = vld [vmem:[%s0 + $0xf0] sm:$0xff]
      %v203 = vld [vmem:[%s0 + $0xf8] sm:$0xff]
      %v204 = vld [vmem:[%s0 + $0x100] sm:$0xff]
      %v205 = vld [vmem:[%s0 + $0x108] sm:$0xff]
      %v206 = vld [vmem:[%s1] sm:$0xff]
      %v207 = vld [vmem:[%s1 + $0x8] sm:$0xff]
      %v208 = vld [vmem:[%s1 + $0x10] sm:$0xff]
      %v209 = vld [vmem:[%s1 + $0x18] sm:$0xff]
      %v210 = vld [vmem:[%s1 + $0x20] sm:$0xff]
      %v211 = vld [vmem:[%s1 + $0x28] sm:$0xff]
      %v212 = vld [vmem:[%s1 + $0x30] sm:$0xff]
      %v213 = vld [vmem:[%s1 + $0x38] sm:$0xff]
      %v214 = vld [vmem:[%s1 + $0x40] sm:$0xff]
      %v215 = vld [vmem:[%s1 + $0x48] sm:$0xff]
      %v216 = vld [vmem:[%s1 + $0x50] sm:$0xff]
      %v217 = vld [vmem:[%s1 + $0x58] sm:$0xff]
      %v218 = vld [vmem:[%s1 + $0x60] sm:$0xff]
      %v219 = vld [vmem:[%s1 + $0x68] sm:$0xff]
      %v220 = vld [vmem:[%s1 + $0x70] sm:$0xff]
      %v221 = vld [vmem:[%s1 + $0x78] sm:$0xff]
      %v222 = vld [vmem:[%s1 + $0x80] sm:$0xff]
      %v223 = vld [vmem:[%s1 + $0x88] sm:$0xff]
      %v224 = vld [vmem:[%s1 + $0x90] sm:$0xff]
      %v225 = vld [vmem:[%s1 + $0x98] sm:$0xff]
      %v226 = vld [vmem:[%s1 + $0xa0] sm:$0xff]
      %v227 = vld [vmem:[%s1 + $0xa8] sm:$0xff]
      %v228 = vld [vmem:[%s1 + $0xb0] sm:$0xff]
      %v229 = vld [vmem:[%s1 + $0xb8] sm:$0xff]
      %v230 = vld [vmem:[%s1 + $0xc0] sm:$0xff]
      %v231 = vld [vmem:[%s1 + $0xc8] sm:$0xff]
      %v232 = vld [vmem:[%s1 + $0xd0] sm:$0xff]
      %v233 = vld [vmem:[%s1 + $0xd8] sm:$0xff]
      %v234 = vld [vmem:[%s1 + $0xe0] sm:$0xff]
      %v235 = vld [vmem:[%s1 + $0xe8] sm:$0xff]
      %v236 = vld [vmem:[%s1 + $0xf0] sm:$0xff]
      %v237 = vld [vmem:[%s1 + $0xf8] sm:$0xff]
      %v238 = vld [vmem:[%s1 + $0x100] sm:$0xff]
      %v239 = vld [vmem:[%s1 + $0x108] sm:$0xff]
      %v240 = vadd.f32 %v172, %v206
      %v241 = vadd.f32 %v173, %v207
      %v242 = vadd.f32 %v174, %v208
      %v243 = vadd.f32 %v175, %v209
      %v244 = vadd.f32 %v176, %v210
      %v245 = vadd.f32 %v177, %v211
      %v246 = vadd.f32 %v178, %v212
      %v247 = vadd.f32 %v179, %v213
      %v248 = vadd.f32 %v180, %v214
      %v249 = vadd.f32 %v181, %v215
      %v250 = vadd.f32 %v182, %v216
      %v251 = vadd.f32 %v183, %v217
      %v252 = vadd.f32 %v184, %v218
      %v253 = vadd.f32 %v185, %v219
      %v254 = vadd.f32 %v186, %v220
      %v255 = vadd.f32 %v187, %v221
      %v256 = vadd.f32 %v188, %v222
      %v257 = vadd.f32 %v189, %v223
      %v258 = vadd.f32 %v190, %v224
      %v259 = vadd.f32 %v191, %v225
      %v260 = vadd.f32 %v192, %v226
      %v261 = vadd.f32 %v193, %v227
      %v262 = vadd.f32 %v194, %v228
      %v263 = vadd.f32 %v195, %v229
      %v264 = vadd.f32 %v196, %v230
      %v265 = vadd.f32 %v197, %v231
      %v266 = vadd.f32 %v198, %v232
      %v267 = vadd.f32 %v199, %v233
      %v268 = vadd.f32 %v200, %v234
      %v269 = vadd.f32 %v201, %v235
      %v270 = vadd.f32 %v202, %v236
      %v271 = vadd.f32 %v203, %v237
      %v272 = vadd.f32 %v204, %v238
      %v273 = vadd.f32 %v205, %v239
      %274 = vxpose.xlu0.b32.start [1/16] %v240, 128
      %275 = vxpose.xlu0.b32.cont [2/16] %v241, 128
      %276 = vxpose.xlu0.b32.cont [3/16] %v242, 128
      %277 = vxpose.xlu0.b32.cont [4/16] %v243, 128
      %278 = vxpose.xlu0.b32.cont [5/16] %v244, 128
      %279 = vxpose.xlu0.b32.cont [6/16] %v245, 128
      %280 = vxpose.xlu0.b32.cont [7/16] %v246, 128
      %281 = vxpose.xlu0.b32.cont [8/16] %v247, 128
      %282 = vxpose.xlu0.b32.cont [9/16] %v248, 128
      %283 = vxpose.xlu0.b32.cont [10/16] %v249, 128
      %284 = vxpose.xlu0.b32.cont [11/16] %v250, 128
      %285 = vxpose.xlu0.b32.cont [12/16] %v251, 128
      %286 = vxpose.xlu0.b32.cont [13/16] %v252, 128
      %287 = vxpose.xlu0.b32.cont [14/16] %v253, 128
      %288 = vxpose.xlu0.b32.cont [15/16] %v254, 128
      %289 = vxpose.xlu0.b32.end [16/16] %v255, 128
      %v290 = vpop.trf.xlu0
      %v291 = vpop.trf.xlu0
      %v292 = vpop.trf.xlu0
      %v293 = vpop.trf.xlu0
      %v294 = vpop.trf.xlu0
      %v295 = vpop.trf.xlu0
      %v296 = vpop.trf.xlu0
      %v297 = vpop.trf.xlu0
      %v298 = vpop.trf.xlu0
      %v299 = vpop.trf.xlu0
      %v300 = vpop.trf.xlu0
      %v301 = vpop.trf.xlu0
      %v302 = vpop.trf.xlu0
      %v303 = vpop.trf.xlu0
      %v304 = vpop.trf.xlu0
      %v305 = vpop.trf.xlu0
      %306 = vxpose.xlu0.b32.start [1/16] %v256, 128
      %307 = vxpose.xlu0.b32.cont [2/16] %v257, 128
      %308 = vxpose.xlu0.b32.cont [3/16] %v258, 128
      %309 = vxpose.xlu0.b32.cont [4/16] %v259, 128
      %310 = vxpose.xlu0.b32.cont [5/16] %v260, 128
      %311 = vxpose.xlu0.b32.cont [6/16] %v261, 128
      %312 = vxpose.xlu0.b32.cont [7/16] %v262, 128
      %313 = vxpose.xlu0.b32.cont [8/16] %v263, 128
      %314 = vxpose.xlu0.b32.cont [9/16] %v264, 128
      %315 = vxpose.xlu0.b32.cont [10/16] %v265, 128
      %316 = vxpose.xlu0.b32.cont [11/16] %v266, 128
      %317 = vxpose.xlu0.b32.cont [12/16] %v267, 128
      %318 = vxpose.xlu0.b32.cont [13/16] %v268, 128
      %319 = vxpose.xlu0.b32.cont [14/16] %v269, 128
      %320 = vxpose.xlu0.b32.cont [15/16] %v270, 128
      %321 = vxpose.xlu0.b32.end [16/16] %v271, 128
      %v322 = vpop.trf.xlu0
      %v323 = vpop.trf.xlu0
      %v324 = vpop.trf.xlu0
      %v325 = vpop.trf.xlu0
      %v326 = vpop.trf.xlu0
      %v327 = vpop.trf.xlu0
      %v328 = vpop.trf.xlu0
      %v329 = vpop.trf.xlu0
      %v330 = vpop.trf.xlu0
      %v331 = vpop.trf.xlu0
      %v332 = vpop.trf.xlu0
      %v333 = vpop.trf.xlu0
      %v334 = vpop.trf.xlu0
      %v335 = vpop.trf.xlu0
      %v336 = vpop.trf.xlu0
      %v337 = vpop.trf.xlu0
      %338 = vxpose.xlu0.b32.start [1/16] %v272, 128
      %339 = vxpose.xlu0.b32.cont [2/16] %v273, 128
      %340 = vxpose.xlu0.b32.cont [3/16] 0.0, 128
      %341 = vxpose.xlu0.b32.cont [4/16] 0.0, 128
      %342 = vxpose.xlu0.b32.cont [5/16] 0.0, 128
      %343 = vxpose.xlu0.b32.cont [6/16] 0.0, 128
      %344 = vxpose.xlu0.b32.cont [7/16] 0.0, 128
      %345 = vxpose.xlu0.b32.cont [8/16] 0.0, 128
      %346 = vxpose.xlu0.b32.cont [9/16] 0.0, 128
      %347 = vxpose.xlu0.b32.cont [10/16] 0.0, 128
      %348 = vxpose.xlu0.b32.cont [11/16] 0.0, 128
      %349 = vxpose.xlu0.b32.cont [12/16] 0.0, 128
      %350 = vxpose.xlu0.b32.cont [13/16] 0.0, 128
      %351 = vxpose.xlu0.b32.cont [14/16] 0.0, 128
      %352 = vxpose.xlu0.b32.cont [15/16] 0.0, 128
      %353 = vxpose.xlu0.b32.end [16/16] 0.0, 128
      %v354 = vpop.trf.xlu0
      %v355 = vpop.trf.xlu0
      %v356 = vpop.trf.xlu0
      %v357 = vpop.trf.xlu0
      %v358 = vpop.trf.xlu0
      %v359 = vpop.trf.xlu0
      %v360 = vpop.trf.xlu0
      %v361 = vpop.trf.xlu0
      %v362 = vpop.trf.xlu0
      %v363 = vpop.trf.xlu0
      %v364 = vpop.trf.xlu0
      %v365 = vpop.trf.xlu0
      %v366 = vpop.trf.xlu0
      %v367 = vpop.trf.xlu0
      %v368 = vpop.trf.xlu0
      %v369 = vpop.trf.xlu0
      %v370 = vpack.c.bf16 %v291, %v290
      %v371 = vpack.c.bf16 %v323, %v322
      %v372 = vpack.c.bf16 %v355, %v354
      %v373 = vpack.c.bf16 %v293, %v292
      %v374 = vpack.c.bf16 %v325, %v324
      %v375 = vpack.c.bf16 %v357, %v356
      %v376 = vpack.c.bf16 %v295, %v294
      %v377 = vpack.c.bf16 %v327, %v326
      %v378 = vpack.c.bf16 %v359, %v358
      %v379 = vpack.c.bf16 %v296, %v296
      %v380 = vpack.c.bf16 %v328, %v328
      %v381 = vpack.c.bf16 %v360, %v360
      %v382 = vld [vmem:[%s165] sm:$0xff]
      %v383 = vld [vmem:[%s165 + $0x8] sm:$0xff]
      %v384 = vld [vmem:[%s165 + $0x10] sm:$0xff]
      %v385 = vld [vmem:[%s165 + $0x18] sm:$0xf]
      %v386 = vld [vmem:[%s165 + $0x1c] sm:$0xff]
      %v387 = vld [vmem:[%s165 + $0x24] sm:$0xff]
      %v388 = vld [vmem:[%s165 + $0x2c] sm:$0xff]
      %v389 = vld [vmem:[%s165 + $0x34] sm:$0xf]
      %v390 = vld [vmem:[%s165 + $0x38] sm:$0xff]
      %v391 = vld [vmem:[%s165 + $0x40] sm:$0xff]
      %v392 = vld [vmem:[%s165 + $0x48] sm:$0xff]
      %v393 = vld [vmem:[%s165 + $0x50] sm:$0xf]
      %v394 = vld [vmem:[%s165 + $0x54] sm:$0xff]
      %v395 = vld [vmem:[%s165 + $0x5c] sm:$0xff]
      %v396 = vld [vmem:[%s165 + $0x64] sm:$0xff]
      %v397 = vld [vmem:[%s165 + $0x6c] sm:$0xf]
      %v398 = vld [vmem:[%s165 + $0x70] sm:$0xff]
      %v399 = vld [vmem:[%s165 + $0x78] sm:$0xff]
      %v400 = vld [vmem:[%s165 + $0x80] sm:$0xff]
      %v401 = vld [vmem:[%s165 + $0x88] sm:$0xf]
      %v402 = vld [vmem:[%s165 + $0x8c] sm:$0xff]
      %v403 = vld [vmem:[%s165 + $0x94] sm:$0xff]
      %v404 = vld [vmem:[%s165 + $0x9c] sm:$0xff]
      %v405 = vld [vmem:[%s165 + $0xa4] sm:$0xf]
      %v406 = vld [vmem:[%s165 + $0xa8] sm:$0xff]
      %v407 = vld [vmem:[%s165 + $0xb0] sm:$0xff]
      %v408 = vld [vmem:[%s165 + $0xb8] sm:$0xff]
      %v409 = vld [vmem:[%s165 + $0xc0] sm:$0xf]
      %v410 = vld [vmem:[%s165 + $0xc4] sm:$0xff]
      %v411 = vld [vmem:[%s165 + $0xcc] sm:$0xff]
      %v412 = vld [vmem:[%s165 + $0xd4] sm:$0xff]
      %v413 = vld [vmem:[%s165 + $0xdc] sm:$0xf]
      %v414 = vld [vmem:[%s165 + $0xe0] sm:$0xff]
      %v415 = vld [vmem:[%s165 + $0xe8] sm:$0xff]
      %v416 = vld [vmem:[%s165 + $0xf0] sm:$0xff]
      %v417 = vld [vmem:[%s165 + $0xf8] sm:$0xf]
      %v418 = vld [vmem:[%s165 + $0xfc] sm:$0xff]
      %v419 = vld [vmem:[%s165 + $0x104] sm:$0xff]
      %v420 = vld [vmem:[%s165 + $0x10c] sm:$0xff]
      %v421 = vld [vmem:[%s165 + $0x114] sm:$0xf]
      %v422 = vld [vmem:[%s165 + $0x118] sm:$0xff]
      %v423 = vld [vmem:[%s165 + $0x120] sm:$0xff]
      %v424 = vld [vmem:[%s165 + $0x128] sm:$0xff]
      %v425 = vld [vmem:[%s165 + $0x130] sm:$0xf]
      %v426 = vld [vmem:[%s165 + $0x134] sm:$0xff]
      %v427 = vld [vmem:[%s165 + $0x13c] sm:$0xff]
      %v428 = vld [vmem:[%s165 + $0x144] sm:$0xff]
      %v429 = vld [vmem:[%s165 + $0x14c] sm:$0xf]
      %v430 = vld [vmem:[%s165 + $0x150] sm:$0xff]
      %v431 = vld [vmem:[%s165 + $0x158] sm:$0xff]
      %v432 = vld [vmem:[%s165 + $0x160] sm:$0xff]
      %v433 = vld [vmem:[%s165 + $0x168] sm:$0xf]
      %v434 = vld [vmem:[%s165 + $0x16c] sm:$0xff]
      %v435 = vld [vmem:[%s165 + $0x174] sm:$0xff]
      %v436 = vld [vmem:[%s165 + $0x17c] sm:$0xff]
      %v437 = vld [vmem:[%s165 + $0x184] sm:$0xf]
      %v438 = vld [vmem:[%s165 + $0x188] sm:$0xff]
      %v439 = vld [vmem:[%s165 + $0x190] sm:$0xff]
      %v440 = vld [vmem:[%s165 + $0x198] sm:$0xff]
      %v441 = vld [vmem:[%s165 + $0x1a0] sm:$0xf]
      %v442 = vld [vmem:[%s165 + $0x1a4] sm:$0xff]
      %v443 = vld [vmem:[%s165 + $0x1ac] sm:$0xff]
      %v444 = vld [vmem:[%s165 + $0x1b4] sm:$0xff]
      %v445 = vld [vmem:[%s165 + $0x1bc] sm:$0xf]
      %v446 = vld [vmem:[%s165 + $0x1c0] sm:$0xff]
      %v447 = vld [vmem:[%s165 + $0x1c8] sm:$0xff]
      %v448 = vld [vmem:[%s165 + $0x1d0] sm:$0xff]
      %v449 = vld [vmem:[%s165 + $0x1d8] sm:$0xf]
      %v450 = vld [vmem:[%s165 + $0x1dc] sm:$0xff]
      %v451 = vld [vmem:[%s165 + $0x1e4] sm:$0xff]
      %v452 = vld [vmem:[%s165 + $0x1ec] sm:$0xff]
      %v453 = vld [vmem:[%s165 + $0x1f4] sm:$0xf]
      %v454 = vld [vmem:[%s165 + $0x1f8] sm:$0xff]
      %v455 = vld [vmem:[%s165 + $0x200] sm:$0xff]
      %v456 = vld [vmem:[%s165 + $0x208] sm:$0xff]
      %v457 = vld [vmem:[%s165 + $0x210] sm:$0xf]
      %v458 = vld [vmem:[%s165 + $0x214] sm:$0xff]
      %v459 = vld [vmem:[%s165 + $0x21c] sm:$0xff]
      %v460 = vld [vmem:[%s165 + $0x224] sm:$0xff]
      %v461 = vld [vmem:[%s165 + $0x22c] sm:$0xf]
      %v462 = vld [vmem:[%s165 + $0x230] sm:$0xff]
      %v463 = vld [vmem:[%s165 + $0x238] sm:$0xff]
      %v464 = vld [vmem:[%s165 + $0x240] sm:$0xff]
      %v465 = vld [vmem:[%s165 + $0x248] sm:$0xf]
      %v466 = vld [vmem:[%s165 + $0x24c] sm:$0xff]
      %v467 = vld [vmem:[%s165 + $0x254] sm:$0xff]
      %v468 = vld [vmem:[%s165 + $0x25c] sm:$0xff]
      %v469 = vld [vmem:[%s165 + $0x264] sm:$0xf]
      %v470 = vld [vmem:[%s165 + $0x268] sm:$0xff]
      %v471 = vld [vmem:[%s165 + $0x270] sm:$0xff]
      %v472 = vld [vmem:[%s165 + $0x278] sm:$0xff]
      %v473 = vld [vmem:[%s165 + $0x280] sm:$0xf]
      %v474 = vld [vmem:[%s165 + $0x284] sm:$0xff]
      %v475 = vld [vmem:[%s165 + $0x28c] sm:$0xff]
      %v476 = vld [vmem:[%s165 + $0x294] sm:$0xff]
      %v477 = vld [vmem:[%s165 + $0x29c] sm:$0xf]
      %v478 = vld [vmem:[%s165 + $0x2a0] sm:$0xff]
      %v479 = vld [vmem:[%s165 + $0x2a8] sm:$0xff]
      %v480 = vld [vmem:[%s165 + $0x2b0] sm:$0xff]
      %v481 = vld [vmem:[%s165 + $0x2b8] sm:$0xf]
      %v482 = vld [vmem:[%s165 + $0x2bc] sm:$0xff]
      %v483 = vld [vmem:[%s165 + $0x2c4] sm:$0xff]
      %v484 = vld [vmem:[%s165 + $0x2cc] sm:$0xff]
      %v485 = vld [vmem:[%s165 + $0x2d4] sm:$0xf]
      %v486 = vld [vmem:[%s165 + $0x2d8] sm:$0xff]
      %v487 = vld [vmem:[%s165 + $0x2e0] sm:$0xff]
      %v488 = vld [vmem:[%s165 + $0x2e8] sm:$0xff]
      %v489 = vld [vmem:[%s165 + $0x2f0] sm:$0xf]
      %v490 = vld [vmem:[%s165 + $0x2f4] sm:$0xff]
      %v491 = vld [vmem:[%s165 + $0x2fc] sm:$0xff]
      %v492 = vld [vmem:[%s165 + $0x304] sm:$0xff]
      %v493 = vld [vmem:[%s165 + $0x30c] sm:$0xf]
      %v494 = vld [vmem:[%s165 + $0x310] sm:$0xff]
      %v495 = vld [vmem:[%s165 + $0x318] sm:$0xff]
      %v496 = vld [vmem:[%s165 + $0x320] sm:$0xff]
      %v497 = vld [vmem:[%s165 + $0x328] sm:$0xf]
      %v498 = vld [vmem:[%s165 + $0x32c] sm:$0xff]
      %v499 = vld [vmem:[%s165 + $0x334] sm:$0xff]
      %v500 = vld [vmem:[%s165 + $0x33c] sm:$0xff]
      %v501 = vld [vmem:[%s165 + $0x344] sm:$0xf]
      %v502 = vld [vmem:[%s165 + $0x348] sm:$0xff]
      %v503 = vld [vmem:[%s165 + $0x350] sm:$0xff]
      %v504 = vld [vmem:[%s165 + $0x358] sm:$0xff]
      %v505 = vld [vmem:[%s165 + $0x360] sm:$0xf]
      %v506 = vld [vmem:[%s165 + $0x364] sm:$0xff]
      %v507 = vld [vmem:[%s165 + $0x36c] sm:$0xff]
      %v508 = vld [vmem:[%s165 + $0x374] sm:$0xff]
      %v509 = vld [vmem:[%s165 + $0x37c] sm:$0xf]
      %v510 = vld [vmem:[%s165 + $0x380] sm:$0xff]
      %v511 = vld [vmem:[%s165 + $0x388] sm:$0xff]
      %v512 = vld [vmem:[%s165 + $0x390] sm:$0xff]
      %v513 = vld [vmem:[%s165 + $0x398] sm:$0xf]
      %v514 = vld [vmem:[%s165 + $0x39c] sm:$0xff]
      %v515 = vld [vmem:[%s165 + $0x3a4] sm:$0xff]
      %v516 = vld [vmem:[%s165 + $0x3ac] sm:$0xff]
      %v517 = vld [vmem:[%s165 + $0x3b4] sm:$0xf]
      %v654 = vunpack.c.l.b16 %v382
      %v655 = vunpack.c.h.b16 %v382
      %v656 = vunpack.c.l.b16 %v383
      %v657 = vunpack.c.h.b16 %v383
      %v658 = vunpack.c.l.b16 %v384
      %v659 = vunpack.c.h.b16 %v384
      %v660 = vunpack.c.l.b16 %v385
      %v661 = vunpack.c.l.b16 %v386
      %v662 = vunpack.c.h.b16 %v386
      %v663 = vunpack.c.l.b16 %v387
      %v664 = vunpack.c.h.b16 %v387
      %v665 = vunpack.c.l.b16 %v388
      %v666 = vunpack.c.h.b16 %v388
      %v667 = vunpack.c.l.b16 %v389
      %v668 = vunpack.c.l.b16 %v390
      %v669 = vunpack.c.h.b16 %v390
      %v670 = vunpack.c.l.b16 %v391
      %v671 = vunpack.c.h.b16 %v391
      %v672 = vunpack.c.l.b16 %v392
      %v673 = vunpack.c.h.b16 %v392
      %v674 = vunpack.c.l.b16 %v393
      %v675 = vunpack.c.l.b16 %v394
      %v676 = vunpack.c.h.b16 %v394
      %v677 = vunpack.c.l.b16 %v395
      %v678 = vunpack.c.h.b16 %v395
      %v679 = vunpack.c.l.b16 %v396
      %v680 = vunpack.c.h.b16 %v396
      %v681 = vunpack.c.l.b16 %v397
      %v682 = vunpack.c.l.b16 %v398
      %v683 = vunpack.c.h.b16 %v398
      %v684 = vunpack.c.l.b16 %v399
      %v685 = vunpack.c.h.b16 %v399
      %v686 = vunpack.c.l.b16 %v400
      %v687 = vunpack.c.h.b16 %v400
      %v688 = vunpack.c.l.b16 %v401
      %v689 = vunpack.c.l.b16 %v402
      %v690 = vunpack.c.h.b16 %v402
      %v691 = vunpack.c.l.b16 %v403
      %v692 = vunpack.c.h.b16 %v403
      %v693 = vunpack.c.l.b16 %v404
      %v694 = vunpack.c.h.b16 %v404
      %v695 = vunpack.c.l.b16 %v405
      %v696 = vunpack.c.l.b16 %v406
      %v697 = vunpack.c.h.b16 %v406
      %v698 = vunpack.c.l.b16 %v407
      %v699 = vunpack.c.h.b16 %v407
      %v700 = vunpack.c.l.b16 %v408
      %v701 = vunpack.c.h.b16 %v408
      %v702 = vunpack.c.l.b16 %v409
      %v703 = vunpack.c.l.b16 %v410
      %v704 = vunpack.c.h.b16 %v410
      %v705 = vunpack.c.l.b16 %v411
      %v706 = vunpack.c.h.b16 %v411
      %v707 = vunpack.c.l.b16 %v412
      %v708 = vunpack.c.h.b16 %v412
      %v709 = vunpack.c.l.b16 %v413
      %v710 = vunpack.c.l.b16 %v414
      %v711 = vunpack.c.h.b16 %v414
      %v712 = vunpack.c.l.b16 %v415
      %v713 = vunpack.c.h.b16 %v415
      %v714 = vunpack.c.l.b16 %v416
      %v715 = vunpack.c.h.b16 %v416
      %v716 = vunpack.c.l.b16 %v417
      %v717 = vunpack.c.l.b16 %v418
      %v718 = vunpack.c.h.b16 %v418
      %v719 = vunpack.c.l.b16 %v419
      %v720 = vunpack.c.h.b16 %v419
      %v721 = vunpack.c.l.b16 %v420
      %v722 = vunpack.c.h.b16 %v420
      %v723 = vunpack.c.l.b16 %v421
      %v724 = vunpack.c.l.b16 %v422
      %v725 = vunpack.c.h.b16 %v422
      %v726 = vunpack.c.l.b16 %v423
      %v727 = vunpack.c.h.b16 %v423
      %v728 = vunpack.c.l.b16 %v424
      %v729 = vunpack.c.h.b16 %v424
      %v730 = vunpack.c.l.b16 %v425
      %v731 = vunpack.c.l.b16 %v426
      %v732 = vunpack.c.h.b16 %v426
      %v733 = vunpack.c.l.b16 %v427
      %v734 = vunpack.c.h.b16 %v427
      %v735 = vunpack.c.l.b16 %v428
      %v736 = vunpack.c.h.b16 %v428
      %v737 = vunpack.c.l.b16 %v429
      %v738 = vunpack.c.l.b16 %v430
      %v739 = vunpack.c.h.b16 %v430
      %v740 = vunpack.c.l.b16 %v431
      %v741 = vunpack.c.h.b16 %v431
      %v742 = vunpack.c.l.b16 %v432
      %v743 = vunpack.c.h.b16 %v432
      %v744 = vunpack.c.l.b16 %v433
      %v745 = vunpack.c.l.b16 %v434
      %v746 = vunpack.c.h.b16 %v434
      %v747 = vunpack.c.l.b16 %v435
      %v748 = vunpack.c.h.b16 %v435
      %v749 = vunpack.c.l.b16 %v436
      %v750 = vunpack.c.h.b16 %v436
      %v751 = vunpack.c.l.b16 %v437
      %v752 = vunpack.c.l.b16 %v438
      %v753 = vunpack.c.h.b16 %v438
      %v754 = vunpack.c.l.b16 %v439
      %v755 = vunpack.c.h.b16 %v439
      %v756 = vunpack.c.l.b16 %v440
      %v757 = vunpack.c.h.b16 %v440
      %v758 = vunpack.c.l.b16 %v441
      %v759 = vunpack.c.l.b16 %v442
      %v760 = vunpack.c.h.b16 %v442
      %v761 = vunpack.c.l.b16 %v443
      %v762 = vunpack.c.h.b16 %v443
      %v763 = vunpack.c.l.b16 %v444
      %v764 = vunpack.c.h.b16 %v444
      %v765 = vunpack.c.l.b16 %v445
      %v766 = vunpack.c.l.b16 %v446
      %v767 = vunpack.c.h.b16 %v446
      %v768 = vunpack.c.l.b16 %v447
      %v769 = vunpack.c.h.b16 %v447
      %v770 = vunpack.c.l.b16 %v448
      %v771 = vunpack.c.h.b16 %v448
      %v772 = vunpack.c.l.b16 %v449
      %v773 = vunpack.c.l.b16 %v450
      %v774 = vunpack.c.h.b16 %v450
      %v775 = vunpack.c.l.b16 %v451
      %v776 = vunpack.c.h.b16 %v451
      %v777 = vunpack.c.l.b16 %v452
      %v778 = vunpack.c.h.b16 %v452
      %v779 = vunpack.c.l.b16 %v453
      %v780 = vunpack.c.l.b16 %v454
      %v781 = vunpack.c.h.b16 %v454
      %v782 = vunpack.c.l.b16 %v455
      %v783 = vunpack.c.h.b16 %v455
      %v784 = vunpack.c.l.b16 %v456
      %v785 = vunpack.c.h.b16 %v456
      %v786 = vunpack.c.l.b16 %v457
      %v787 = vunpack.c.l.b16 %v458
      %v788 = vunpack.c.h.b16 %v458
      %v789 = vunpack.c.l.b16 %v459
      %v790 = vunpack.c.h.b16 %v459
      %v791 = vunpack.c.l.b16 %v460
      %v792 = vunpack.c.h.b16 %v460
      %v793 = vunpack.c.l.b16 %v461
      %v794 = vunpack.c.l.b16 %v462
      %v795 = vunpack.c.h.b16 %v462
      %v796 = vunpack.c.l.b16 %v463
      %v797 = vunpack.c.h.b16 %v463
      %v798 = vunpack.c.l.b16 %v464
      %v799 = vunpack.c.h.b16 %v464
      %v800 = vunpack.c.l.b16 %v465
      %v801 = vunpack.c.l.b16 %v466
      %v802 = vunpack.c.h.b16 %v466
      %v803 = vunpack.c.l.b16 %v467
      %v804 = vunpack.c.h.b16 %v467
      %v805 = vunpack.c.l.b16 %v468
      %v806 = vunpack.c.h.b16 %v468
      %v807 = vunpack.c.l.b16 %v469
      %v808 = vunpack.c.l.b16 %v470
      %v809 = vunpack.c.h.b16 %v470
      %v810 = vunpack.c.l.b16 %v471
      %v811 = vunpack.c.h.b16 %v471
      %v812 = vunpack.c.l.b16 %v472
      %v813 = vunpack.c.h.b16 %v472
      %v814 = vunpack.c.l.b16 %v473
      %v815 = vunpack.c.l.b16 %v474
      %v816 = vunpack.c.h.b16 %v474
      %v817 = vunpack.c.l.b16 %v475
      %v818 = vunpack.c.h.b16 %v475
      %v819 = vunpack.c.l.b16 %v476
      %v820 = vunpack.c.h.b16 %v476
      %v821 = vunpack.c.l.b16 %v477
      %v822 = vunpack.c.l.b16 %v478
      %v823 = vunpack.c.h.b16 %v478
      %v824 = vunpack.c.l.b16 %v479
      %v825 = vunpack.c.h.b16 %v479
      %v826 = vunpack.c.l.b16 %v480
      %v827 = vunpack.c.h.b16 %v480
      %v828 = vunpack.c.l.b16 %v481
      %v829 = vunpack.c.l.b16 %v482
      %v830 = vunpack.c.h.b16 %v482
      %v831 = vunpack.c.l.b16 %v483
      %v832 = vunpack.c.h.b16 %v483
      %v833 = vunpack.c.l.b16 %v484
      %v834 = vunpack.c.h.b16 %v484
      %v835 = vunpack.c.l.b16 %v485
      %v836 = vunpack.c.l.b16 %v486
      %v837 = vunpack.c.h.b16 %v486
      %v838 = vunpack.c.l.b16 %v487
      %v839 = vunpack.c.h.b16 %v487
      %v840 = vunpack.c.l.b16 %v488
      %v841 = vunpack.c.h.b16 %v488
      %v842 = vunpack.c.l.b16 %v489
      %v843 = vunpack.c.l.b16 %v490
      %v844 = vunpack.c.h.b16 %v490
      %v845 = vunpack.c.l.b16 %v491
      %v846 = vunpack.c.h.b16 %v491
      %v847 = vunpack.c.l.b16 %v492
      %v848 = vunpack.c.h.b16 %v492
      %v849 = vunpack.c.l.b16 %v493
      %v850 = vunpack.c.l.b16 %v494
      %v851 = vunpack.c.h.b16 %v494
      %v852 = vunpack.c.l.b16 %v495
      %v853 = vunpack.c.h.b16 %v495
      %v854 = vunpack.c.l.b16 %v496
      %v855 = vunpack.c.h.b16 %v496
      %v856 = vunpack.c.l.b16 %v497
      %v857 = vunpack.c.l.b16 %v498
      %v858 = vunpack.c.h.b16 %v498
      %v859 = vunpack.c.l.b16 %v499
      %v860 = vunpack.c.h.b16 %v499
      %v861 = vunpack.c.l.b16 %v500
      %v862 = vunpack.c.h.b16 %v500
      %v863 = vunpack.c.l.b16 %v501
      %v864 = vunpack.c.l.b16 %v502
      %v865 = vunpack.c.h.b16 %v502
      %v866 = vunpack.c.l.b16 %v503
      %v867 = vunpack.c.h.b16 %v503
      %v868 = vunpack.c.l.b16 %v504
      %v869 = vunpack.c.h.b16 %v504
      %v870 = vunpack.c.l.b16 %v505
      %v871 = vunpack.c.l.b16 %v506
      %v872 = vunpack.c.h.b16 %v506
      %v873 = vunpack.c.l.b16 %v507
      %v874 = vunpack.c.h.b16 %v507
      %v875 = vunpack.c.l.b16 %v508
      %v876 = vunpack.c.h.b16 %v508
      %v877 = vunpack.c.l.b16 %v509
      %v878 = vunpack.c.l.b16 %v510
      %v879 = vunpack.c.h.b16 %v510
      %v880 = vunpack.c.l.b16 %v511
      %v881 = vunpack.c.h.b16 %v511
      %v882 = vunpack.c.l.b16 %v512
      %v883 = vunpack.c.h.b16 %v512
      %v884 = vunpack.c.l.b16 %v513
      %v885 = vunpack.c.l.b16 %v514
      %v886 = vunpack.c.h.b16 %v514
      %v887 = vunpack.c.l.b16 %v515
      %v888 = vunpack.c.h.b16 %v515
      %v889 = vunpack.c.l.b16 %v516
      %v890 = vunpack.c.h.b16 %v516
      %v891 = vunpack.c.l.b16 %v517
      %v892 = vpack.c.b16 %v661, %v654
      %v893 = vpack.c.b16 %v662, %v655
      %v894 = vpack.c.b16 %v663, %v656
      %v895 = vpack.c.b16 %v664, %v657
      %v896 = vpack.c.b16 %v665, %v658
      %v897 = vpack.c.b16 %v666, %v659
      %v898 = vpack.c.b16 %v667, %v660
      %v899 = vpack.c.b16 %v675, %v668
      %v900 = vpack.c.b16 %v676, %v669
      %v901 = vpack.c.b16 %v677, %v670
      %v902 = vpack.c.b16 %v678, %v671
      %v903 = vpack.c.b16 %v679, %v672
      %v904 = vpack.c.b16 %v680, %v673
      %v905 = vpack.c.b16 %v681, %v674
      %v906 = vpack.c.b16 %v689, %v682
      %v907 = vpack.c.b16 %v690, %v683
      %v908 = vpack.c.b16 %v691, %v684
      %v909 = vpack.c.b16 %v692, %v685
      %v910 = vpack.c.b16 %v693, %v686
      %v911 = vpack.c.b16 %v694, %v687
      %v912 = vpack.c.b16 %v695, %v688
      %v913 = vpack.c.b16 %v703, %v696
      %v914 = vpack.c.b16 %v704, %v697
      %v915 = vpack.c.b16 %v705, %v698
      %v916 = vpack.c.b16 %v706, %v699
      %v917 = vpack.c.b16 %v707, %v700
      %v918 = vpack.c.b16 %v708, %v701
      %v919 = vpack.c.b16 %v709, %v702
      %v920 = vpack.c.b16 %v717, %v710
      %v921 = vpack.c.b16 %v718, %v711
      %v922 = vpack.c.b16 %v719, %v712
      %v923 = vpack.c.b16 %v720, %v713
      %v924 = vpack.c.b16 %v721, %v714
      %v925 = vpack.c.b16 %v722, %v715
      %v926 = vpack.c.b16 %v723, %v716
      %v927 = vpack.c.b16 %v731, %v724
      %v928 = vpack.c.b16 %v732, %v725
      %v929 = vpack.c.b16 %v733, %v726
      %v930 = vpack.c.b16 %v734, %v727
      %v931 = vpack.c.b16 %v735, %v728
      %v932 = vpack.c.b16 %v736, %v729
      %v933 = vpack.c.b16 %v737, %v730
      %v934 = vpack.c.b16 %v745, %v738
      %v935 = vpack.c.b16 %v746, %v739
      %v936 = vpack.c.b16 %v747, %v740
      %v937 = vpack.c.b16 %v748, %v741
      %v938 = vpack.c.b16 %v749, %v742
      %v939 = vpack.c.b16 %v750, %v743
      %v940 = vpack.c.b16 %v751, %v744
      %v941 = vpack.c.b16 %v759, %v752
      %v942 = vpack.c.b16 %v760, %v753
      %v943 = vpack.c.b16 %v761, %v754
      %v944 = vpack.c.b16 %v762, %v755
      %v945 = vpack.c.b16 %v763, %v756
      %v946 = vpack.c.b16 %v764, %v757
      %v947 = vpack.c.b16 %v765, %v758
      %v948 = vpack.c.b16 %v773, %v766
      %v949 = vpack.c.b16 %v774, %v767
      %v950 = vpack.c.b16 %v775, %v768
      %v951 = vpack.c.b16 %v776, %v769
      %v952 = vpack.c.b16 %v777, %v770
      %v953 = vpack.c.b16 %v778, %v771
      %v954 = vpack.c.b16 %v779, %v772
      %v955 = vpack.c.b16 %v787, %v780
      %v956 = vpack.c.b16 %v788, %v781
      %v957 = vpack.c.b16 %v789, %v782
      %v958 = vpack.c.b16 %v790, %v783
      %v959 = vpack.c.b16 %v791, %v784
      %v960 = vpack.c.b16 %v792, %v785
      %v961 = vpack.c.b16 %v793, %v786
      %v962 = vpack.c.b16 %v801, %v794
      %v963 = vpack.c.b16 %v802, %v795
      %v964 = vpack.c.b16 %v803, %v796
      %v965 = vpack.c.b16 %v804, %v797
      %v966 = vpack.c.b16 %v805, %v798
      %v967 = vpack.c.b16 %v806, %v799
      %v968 = vpack.c.b16 %v807, %v800
      %v969 = vpack.c.b16 %v815, %v808
      %v970 = vpack.c.b16 %v816, %v809
      %v971 = vpack.c.b16 %v817, %v810
      %v972 = vpack.c.b16 %v818, %v811
      %v973 = vpack.c.b16 %v819, %v812
      %v974 = vpack.c.b16 %v820, %v813
      %v975 = vpack.c.b16 %v821, %v814
      %v976 = vpack.c.b16 %v829, %v822
      %v977 = vpack.c.b16 %v830, %v823
      %v978 = vpack.c.b16 %v831, %v824
      %v979 = vpack.c.b16 %v832, %v825
      %v980 = vpack.c.b16 %v833, %v826
      %v981 = vpack.c.b16 %v834, %v827
      %v982 = vpack.c.b16 %v835, %v828
      %v983 = vpack.c.b16 %v843, %v836
      %v984 = vpack.c.b16 %v844, %v837
      %v985 = vpack.c.b16 %v845, %v838
      %v986 = vpack.c.b16 %v846, %v839
      %v987 = vpack.c.b16 %v847, %v840
      %v988 = vpack.c.b16 %v848, %v841
      %v989 = vpack.c.b16 %v849, %v842
      %v990 = vpack.c.b16 %v857, %v850
      %v991 = vpack.c.b16 %v858, %v851
      %v992 = vpack.c.b16 %v859, %v852
      %v993 = vpack.c.b16 %v860, %v853
      %v994 = vpack.c.b16 %v861, %v854
      %v995 = vpack.c.b16 %v862, %v855
      %v996 = vpack.c.b16 %v863, %v856
      %v997 = vpack.c.b16 %v871, %v864
      %v998 = vpack.c.b16 %v872, %v865
      %v999 = vpack.c.b16 %v873, %v866
      %v1000 = vpack.c.b16 %v874, %v867
      %v1001 = vpack.c.b16 %v875, %v868
      %v1002 = vpack.c.b16 %v876, %v869
      %v1003 = vpack.c.b16 %v877, %v870
      %v1004 = vpack.c.b16 %v885, %v878
      %v1005 = vpack.c.b16 %v886, %v879
      %v1006 = vpack.c.b16 %v887, %v880
      %v1007 = vpack.c.b16 %v888, %v881
      %v1008 = vpack.c.b16 %v889, %v882
      %v1009 = vpack.c.b16 %v890, %v883
      %v1010 = vpack.c.b16 %v891, %v884
      %vm1130 = vcmask 130048
      %v1132 = vsel %vm1130, %v372, 0
      %v1135 = vsel %vm1130, %v375, 0
      %v1138 = vsel %vm1130, %v378, 0
      %v1141 = vsel %vm1130, %v381, 0
      %1143 = vmatprep.subr.bf16.mxu0 %v893
      %1144 = vmatpush1.bf16.msra.mxu0 %v892
      %1145 = vmatprep.subr.bf16.mxu0 %v900
      %1146 = vmatpush1.bf16.msra.mxu0 %v899
      %1147 = vmatprep.subr.bf16.mxu0 %v907
      %1148 = vmatpush1.bf16.msra.mxu0 %v906
      %1149 = vmatprep.subr.bf16.mxu0 %v914
      %1150 = vmatpush1.bf16.msra.mxu0 %v913
      %1151 = vmatprep.subr.bf16.mxu0 %v921
      %1152 = vmatpush1.bf16.msra.mxu0 %v920
      %1153 = vmatprep.subr.bf16.mxu0 %v928
      %1154 = vmatpush1.bf16.msra.mxu0 %v927
      %1155 = vmatprep.subr.bf16.mxu0 %v935
      %1156 = vmatpush1.bf16.msra.mxu0 %v934
      %1157 = vmatprep.subr.bf16.mxu0 %v942
      %1158 = vmatpush1.bf16.msra.mxu0 %v941
      %1159 = vmatprep.subr.bf16.mxu0 %v949
      %1160 = vmatpush1.bf16.msra.mxu0 %v948
      %1161 = vmatprep.subr.bf16.mxu0 %v956
      %1162 = vmatpush1.bf16.msra.mxu0 %v955
      %1163 = vmatprep.subr.bf16.mxu0 %v963
      %1164 = vmatpush1.bf16.msra.mxu0 %v962
      %1165 = vmatprep.subr.bf16.mxu0 %v970
      %1166 = vmatpush1.bf16.msra.mxu0 %v969
      %1167 = vmatprep.subr.bf16.mxu0 %v977
      %1168 = vmatpush1.bf16.msra.mxu0 %v976
      %1169 = vmatprep.subr.bf16.mxu0 %v984
      %1170 = vmatpush1.bf16.msra.mxu0 %v983
      %1171 = vmatprep.subr.bf16.mxu0 %v991
      %1172 = vmatpush1.bf16.msra.mxu0 %v990
      %1173 = vmatprep.subr.bf16.mxu0 %v998
      %1174 = vmatpush1.bf16.msra.mxu0 %v997
      %1175 = vmatprep.mubr.bf16.mxu0 %v371
      %1176 = vmatmul.mubr.bf16.gmra.mrb[0].mxu0 %v370
      %v1177 = vpop.f32.mrb[0].mxu0
      %v1178 = vadd.f32 0.0, %v1177
      %v1179 = vpop.f32.mrb[0].mxu0
      %v1180 = vadd.f32 0.0, %v1179
      %v1181 = vpop.f32.mrb[0].mxu0
      %v1182 = vadd.f32 0.0, %v1181
      %v1183 = vpop.f32.mrb[0].mxu0
      %v1184 = vadd.f32 0.0, %v1183
      %1185 = vmatprep.mubr.bf16.mxu0 %v374
      %1186 = vmatmul.mubr.bf16.gmra.mrb[0].mxu0 %v373
      %v1187 = vpop.f32.mrb[0].mxu0
      %v1188 = vadd.f32 0.0, %v1187
      %v1189 = vpop.f32.mrb[0].mxu0
      %v1190 = vadd.f32 0.0, %v1189
      %v1191 = vpop.f32.mrb[0].mxu0
      %v1192 = vadd.f32 0.0, %v1191
      %v1193 = vpop.f32.mrb[0].mxu0
      %v1194 = vadd.f32 0.0, %v1193
      %1195 = vmatprep.mubr.bf16.mxu0 %v377
      %1196 = vmatmul.mubr.bf16.gmra.mrb[0].mxu0 %v376
      %v1197 = vpop.f32.mrb[0].mxu0
      %v1198 = vadd.f32 0.0, %v1197
      %v1199 = vpop.f32.mrb[0].mxu0
      %v1200 = vadd.f32 0.0, %v1199
      %v1201 = vpop.f32.mrb[0].mxu0
      %v1202 = vadd.f32 0.0, %v1201
      %v1203 = vpop.f32.mrb[0].mxu0
      %v1204 = vadd.f32 0.0, %v1203
      %1205 = vmatprep.mubr.bf16.mxu0 %v380
      %1206 = vmatmul.mubr.bf16.gmra.mrb[0].mxu0 %v379
      %v1207 = vpop.f32.mrb[0].mxu0
      %v1208 = vadd.f32 0.0, %v1207
      %v1209 = vpop.f32.mrb[0].mxu0
      %v1210 = vadd.f32 0.0, %v1209
      %v1211 = vpop.f32.mrb[0].mxu0
      %v1212 = vpop.f32.mrb[0].mxu0
      %1213 = vdwg.mxu0
      %1214 = vmatprep.subr.bf16.mxu0 %v1005
      %1215 = vmatpush1.bf16.msra.mxu0 %v1004
      %1216 = vmatprep.subr.bf16.mxu0 0
      %1217 = vmatpush1.bf16.msra.mxu0 0
      %1218 = vmatprep.subr.bf16.mxu0 0
      %1219 = vmatpush1.bf16.msra.mxu0 0
      %1220 = vmatprep.subr.bf16.mxu0 0
      %1221 = vmatpush1.bf16.msra.mxu0 0
      %1222 = vmatprep.subr.bf16.mxu0 0
      %1223 = vmatpush1.bf16.msra.mxu0 0
      %1224 = vmatprep.subr.bf16.mxu0 0
      %1225 = vmatpush1.bf16.msra.mxu0 0
      %1226 = vmatprep.subr.bf16.mxu0 0
      %1227 = vmatpush1.bf16.msra.mxu0 0
      %1228 = vmatprep.subr.bf16.mxu0 0
      %1229 = vmatpush1.bf16.msra.mxu0 0
      %1230 = vmatprep.subr.bf16.mxu0 0
      %1231 = vmatpush1.bf16.msra.mxu0 0
      %1232 = vmatprep.subr.bf16.mxu0 0
      %1233 = vmatpush1.bf16.msra.mxu0 0
      %1234 = vmatprep.subr.bf16.mxu0 0
      %1235 = vmatpush1.bf16.msra.mxu0 0
      %1236 = vmatprep.subr.bf16.mxu0 0
      %1237 = vmatpush1.bf16.msra.mxu0 0
      %1238 = vmatprep.subr.bf16.mxu0 0
      %1239 = vmatpush1.bf16.msra.mxu0 0
      %1240 = vmatprep.subr.bf16.mxu0 0
      %1241 = vmatpush1.bf16.msra.mxu0 0
      %1242 = vmatprep.subr.bf16.mxu0 0
      %1243 = vmatpush1.bf16.msra.mxu0 0
      %1244 = vmatprep.subr.bf16.mxu0 0
      %1245 = vmatpush1.bf16.msra.mxu0 0
      %1246 = vmatprep.mubr.bf16.mxu0 0
      %1247 = vmatmul.mubr.bf16.gmra.mrb[0].mxu0 %v1132
      %v1248 = vpop.f32.mrb[0].mxu0
      %v1249 = vadd.f32 %v1178, %v1248
      %v1250 = vpop.f32.mrb[0].mxu0
      %v1251 = vadd.f32 %v1180, %v1250
      %v1252 = vpop.f32.mrb[0].mxu0
      %v1253 = vadd.f32 %v1182, %v1252
      %v1254 = vpop.f32.mrb[0].mxu0
      %v1255 = vadd.f32 %v1184, %v1254
      %1256 = vmatprep.mubr.bf16.mxu0 0
      %1257 = vmatmul.mubr.bf16.gmra.mrb[0].mxu0 %v1135
      %v1258 = vpop.f32.mrb[0].mxu0
      %v1259 = vadd.f32 %v1188, %v1258
      %v1260 = vpop.f32.mrb[0].mxu0
      %v1261 = vadd.f32 %v1190, %v1260
      %v1262 = vpop.f32.mrb[0].mxu0
      %v1263 = vadd.f32 %v1192, %v1262
      %v1264 = vpop.f32.mrb[0].mxu0
      %v1265 = vadd.f32 %v1194, %v1264
      %1266 = vmatprep.mubr.bf16.mxu0 0
      %1267 = vmatmul.mubr.bf16.gmra.mrb[0].mxu0 %v1138
      %v1268 = vpop.f32.mrb[0].mxu0
      %v1269 = vadd.f32 %v1198, %v1268
      %v1270 = vpop.f32.mrb[0].mxu0
      %v1271 = vadd.f32 %v1200, %v1270
      %v1272 = vpop.f32.mrb[0].mxu0
      %v1273 = vadd.f32 %v1202, %v1272
      %v1274 = vpop.f32.mrb[0].mxu0
      %v1275 = vadd.f32 %v1204, %v1274
      %1276 = vmatprep.mubr.bf16.mxu0 0
      %1277 = vmatmul.mubr.bf16.gmra.mrb[0].mxu0 %v1141
      %v1278 = vpop.f32.mrb[0].mxu0
      %v1279 = vadd.f32 %v1208, %v1278
      %v1280 = vpop.f32.mrb[0].mxu0
      %v1281 = vadd.f32 %v1210, %v1280
      %v1282 = vpop.f32.mrb[0].mxu0
      %v1283 = vpop.f32.mrb[0].mxu0
      %1284 = vdwg.mxu0
      %1285 = vmatprep.subr.bf16.mxu0 %v895
      %1286 = vmatpush1.bf16.msra.mxu0 %v894
      %1287 = vmatprep.subr.bf16.mxu0 %v902
      %1288 = vmatpush1.bf16.msra.mxu0 %v901
      %1289 = vmatprep.subr.bf16.mxu0 %v909
      %1290 = vmatpush1.bf16.msra.mxu0 %v908
      %1291 = vmatprep.subr.bf16.mxu0 %v916
      %1292 = vmatpush1.bf16.msra.mxu0 %v915
      %1293 = vmatprep.subr.bf16.mxu0 %v923
      %1294 = vmatpush1.bf16.msra.mxu0 %v922
      %1295 = vmatprep.subr.bf16.mxu0 %v930
      %1296 = vmatpush1.bf16.msra.mxu0 %v929
      %1297 = vmatprep.subr.bf16.mxu0 %v937
      %1298 = vmatpush1.bf16.msra.mxu0 %v936
      %1299 = vmatprep.subr.bf16.mxu0 %v944
      %1300 = vmatpush1.bf16.msra.mxu0 %v943
      %1301 = vmatprep.subr.bf16.mxu0 %v951
      %1302 = vmatpush1.bf16.msra.mxu0 %v950
      %1303 = vmatprep.subr.bf16.mxu0 %v958
      %1304 = vmatpush1.bf16.msra.mxu0 %v957
      %1305 = vmatprep.subr.bf16.mxu0 %v965
      %1306 = vmatpush1.bf16.msra.mxu0 %v964
      %1307 = vmatprep.subr.bf16.mxu0 %v972
      %1308 = vmatpush1.bf16.msra.mxu0 %v971
      %1309 = vmatprep.subr.bf16.mxu0 %v979
      %1310 = vmatpush1.bf16.msra.mxu0 %v978
      %1311 = vmatprep.subr.bf16.mxu0 %v986
      %1312 = vmatpush1.bf16.msra.mxu0 %v985
      %1313 = vmatprep.subr.bf16.mxu0 %v993
      %1314 = vmatpush1.bf16.msra.mxu0 %v992
      %1315 = vmatprep.subr.bf16.mxu0 %v1000
      %1316 = vmatpush1.bf16.msra.mxu0 %v999
      %1317 = vmatprep.mubr.bf16.mxu0 %v371
      %1318 = vmatmul.mubr.bf16.gmra.mrb[0].mxu0 %v370
      %v1319 = vpop.f32.mrb[0].mxu0
      %v1320 = vadd.f32 0.0, %v1319
      %v1321 = vpop.f32.mrb[0].mxu0
      %v1322 = vadd.f32 0.0, %v1321
      %v1323 = vpop.f32.mrb[0].mxu0
      %v1324 = vadd.f32 0.0, %v1323
      %v1325 = vpop.f32.mrb[0].mxu0
      %v1326 = vadd.f32 0.0, %v1325
      %1327 = vmatprep.mubr.bf16.mxu0 %v374
      %1328 = vmatmul.mubr.bf16.gmra.mrb[0].mxu0 %v373
      %v1329 = vpop.f32.mrb[0].mxu0
      %v1330 = vadd.f32 0.0, %v1329
      %v1331 = vpop.f32.mrb[0].mxu0
      %v1332 = vadd.f32 0.0, %v1331
      %v1333 = vpop.f32.mrb[0].mxu0
      %v1334 = vadd.f32 0.0, %v1333
      %v1335 = vpop.f32.mrb[0].mxu0
      %v1336 = vadd.f32 0.0, %v1335
      %1337 = vmatprep.mubr.bf16.mxu0 %v377
      %1338 = vmatmul.mubr.bf16.gmra.mrb[0].mxu0 %v376
      %v1339 = vpop.f32.mrb[0].mxu0
      %v1340 = vadd.f32 0.0, %v1339
      %v1341 = vpop.f32.mrb[0].mxu0
      %v1342 = vadd.f32 0.0, %v1341
      %v1343 = vpop.f32.mrb[0].mxu0
      %v1344 = vadd.f32 0.0, %v1343
      %v1345 = vpop.f32.mrb[0].mxu0
      %v1346 = vadd.f32 0.0, %v1345
      %1347 = vmatprep.mubr.bf16.mxu0 %v380
      %1348 = vmatmul.mubr.bf16.gmra.mrb[0].mxu0 %v379
      %v1349 = vpop.f32.mrb[0].mxu0
      %v1350 = vadd.f32 0.0, %v1349
      %v1351 = vpop.f32.mrb[0].mxu0
      %v1352 = vadd.f32 0.0, %v1351
      %v1353 = vpop.f32.mrb[0].mxu0
      %v1354 = vpop.f32.mrb[0].mxu0
      %1355 = vdwg.mxu0
      %1356 = vmatprep.subr.bf16.mxu0 %v1007
      %1357 = vmatpush1.bf16.msra.mxu0 %v1006
      %1358 = vmatprep.subr.bf16.mxu0 0
      %1359 = vmatpush1.bf16.msra.mxu0 0
      %1360 = vmatprep.subr.bf16.mxu0 0
      %1361 = vmatpush1.bf16.msra.mxu0 0
      %1362 = vmatprep.subr.bf16.mxu0 0
      %1363 = vmatpush1.bf16.msra.mxu0 0
      %1364 = vmatprep.subr.bf16.mxu0 0
      %1365 = vmatpush1.bf16.msra.mxu0 0
      %1366 = vmatprep.subr.bf16.mxu0 0
      %1367 = vmatpush1.bf16.msra.mxu0 0
      %1368 = vmatprep.subr.bf16.mxu0 0
      %1369 = vmatpush1.bf16.msra.mxu0 0
      %1370 = vmatprep.subr.bf16.mxu0 0
      %1371 = vmatpush1.bf16.msra.mxu0 0
      %1372 = vmatprep.subr.bf16.mxu0 0
      %1373 = vmatpush1.bf16.msra.mxu0 0
      %1374 = vmatprep.subr.bf16.mxu0 0
      %1375 = vmatpush1.bf16.msra.mxu0 0
      %1376 = vmatprep.subr.bf16.mxu0 0
      %1377 = vmatpush1.bf16.msra.mxu0 0
      %1378 = vmatprep.subr.bf16.mxu0 0
      %1379 = vmatpush1.bf16.msra.mxu0 0
      %1380 = vmatprep.subr.bf16.mxu0 0
      %1381 = vmatpush1.bf16.msra.mxu0 0
      %1382 = vmatprep.subr.bf16.mxu0 0
      %1383 = vmatpush1.bf16.msra.mxu0 0
      %1384 = vmatprep.subr.bf16.mxu0 0
      %1385 = vmatpush1.bf16.msra.mxu0 0
      %1386 = vmatprep.subr.bf16.mxu0 0
      %1387 = vmatpush1.bf16.msra.mxu0 0
      %1388 = vmatprep.mubr.bf16.mxu0 0
      %1389 = vmatmul.mubr.bf16.gmra.mrb[0].mxu0 %v1132
      %v1390 = vpop.f32.mrb[0].mxu0
      %v1391 = vadd.f32 %v1320, %v1390
      %v1392 = vpop.f32.mrb[0].mxu0
      %v1393 = vadd.f32 %v1322, %v1392
      %v1394 = vpop.f32.mrb[0].mxu0
      %v1395 = vadd.f32 %v1324, %v1394
      %v1396 = vpop.f32.mrb[0].mxu0
      %v1397 = vadd.f32 %v1326, %v1396
      %1398 = vmatprep.mubr.bf16.mxu0 0
      %1399 = vmatmul.mubr.bf16.gmra.mrb[0].mxu0 %v1135
      %v1400 = vpop.f32.mrb[0].mxu0
      %v1401 = vadd.f32 %v1330, %v1400
      %v1402 = vpop.f32.mrb[0].mxu0
      %v1403 = vadd.f32 %v1332, %v1402
      %v1404 = vpop.f32.mrb[0].mxu0
      %v1405 = vadd.f32 %v1334, %v1404
      %v1406 = vpop.f32.mrb[0].mxu0
      %v1407 = vadd.f32 %v1336, %v1406
      %1408 = vmatprep.mubr.bf16.mxu0 0
      %1409 = vmatmul.mubr.bf16.gmra.mrb[0].mxu0 %v1138
      %v1410 = vpop.f32.mrb[0].mxu0
      %v1411 = vadd.f32 %v1340, %v1410
      %v1412 = vpop.f32.mrb[0].mxu0
      %v1413 = vadd.f32 %v1342, %v1412
      %v1414 = vpop.f32.mrb[0].mxu0
      %v1415 = vadd.f32 %v1344, %v1414
      %v1416 = vpop.f32.mrb[0].mxu0
      %v1417 = vadd.f32 %v1346, %v1416
      %1418 = vmatprep.mubr.bf16.mxu0 0
      %1419 = vmatmul.mubr.bf16.gmra.mrb[0].mxu0 %v1141
      %v1420 = vpop.f32.mrb[0].mxu0
      %v1421 = vadd.f32 %v1350, %v1420
      %v1422 = vpop.f32.mrb[0].mxu0
      %v1423 = vadd.f32 %v1352, %v1422
      %v1424 = vpop.f32.mrb[0].mxu0
      %v1425 = vpop.f32.mrb[0].mxu0
      %1426 = vdwg.mxu0
      %1427 = vmatprep.subr.bf16.mxu0 %v897
      %1428 = vmatpush1.bf16.msra.mxu0 %v896
      %1429 = vmatprep.subr.bf16.mxu0 %v904
      %1430 = vmatpush1.bf16.msra.mxu0 %v903
      %1431 = vmatprep.subr.bf16.mxu0 %v911
      %1432 = vmatpush1.bf16.msra.mxu0 %v910
      %1433 = vmatprep.subr.bf16.mxu0 %v918
      %1434 = vmatpush1.bf16.msra.mxu0 %v917
      %1435 = vmatprep.subr.bf16.mxu0 %v925
      %1436 = vmatpush1.bf16.msra.mxu0 %v924
      %1437 = vmatprep.subr.bf16.mxu0 %v932
      %1438 = vmatpush1.bf16.msra.mxu0 %v931
      %1439 = vmatprep.subr.bf16.mxu0 %v939
      %1440 = vmatpush1.bf16.msra.mxu0 %v938
      %1441 = vmatprep.subr.bf16.mxu0 %v946
      %1442 = vmatpush1.bf16.msra.mxu0 %v945
      %1443 = vmatprep.subr.bf16.mxu0 %v953
      %1444 = vmatpush1.bf16.msra.mxu0 %v952
      %1445 = vmatprep.subr.bf16.mxu0 %v960
      %1446 = vmatpush1.bf16.msra.mxu0 %v959
      %1447 = vmatprep.subr.bf16.mxu0 %v967
      %1448 = vmatpush1.bf16.msra.mxu0 %v966
      %1449 = vmatprep.subr.bf16.mxu0 %v974
      %1450 = vmatpush1.bf16.msra.mxu0 %v973
      %1451 = vmatprep.subr.bf16.mxu0 %v981
      %1452 = vmatpush1.bf16.msra.mxu0 %v980
      %1453 = vmatprep.subr.bf16.mxu0 %v988
      %1454 = vmatpush1.bf16.msra.mxu0 %v987
      %1455 = vmatprep.subr.bf16.mxu0 %v995
      %1456 = vmatpush1.bf16.msra.mxu0 %v994
      %1457 = vmatprep.subr.bf16.mxu0 %v1002
      %1458 = vmatpush1.bf16.msra.mxu0 %v1001
      %1459 = vmatprep.mubr.bf16.mxu0 %v371
      %1460 = vmatmul.mubr.bf16.gmra.mrb[0].mxu0 %v370
      %v1461 = vpop.f32.mrb[0].mxu0
      %v1462 = vadd.f32 0.0, %v1461
      %v1463 = vpop.f32.mrb[0].mxu0
      %v1464 = vadd.f32 0.0, %v1463
      %v1465 = vpop.f32.mrb[0].mxu0
      %v1466 = vadd.f32 0.0, %v1465
      %v1467 = vpop.f32.mrb[0].mxu0
      %v1468 = vadd.f32 0.0, %v1467
      %1469 = vmatprep.mubr.bf16.mxu0 %v374
      %1470 = vmatmul.mubr.bf16.gmra.mrb[0].mxu0 %v373
      %v1471 = vpop.f32.mrb[0].mxu0
      %v1472 = vadd.f32 0.0, %v1471
      %v1473 = vpop.f32.mrb[0].mxu0
      %v1474 = vadd.f32 0.0, %v1473
      %v1475 = vpop.f32.mrb[0].mxu0
      %v1476 = vadd.f32 0.0, %v1475
      %v1477 = vpop.f32.mrb[0].mxu0
      %v1478 = vadd.f32 0.0, %v1477
      %1479 = vmatprep.mubr.bf16.mxu0 %v377
      %1480 = vmatmul.mubr.bf16.gmra.mrb[0].mxu0 %v376
      %v1481 = vpop.f32.mrb[0].mxu0
      %v1482 = vadd.f32 0.0, %v1481
      %v1483 = vpop.f32.mrb[0].mxu0
      %v1484 = vadd.f32 0.0, %v1483
      %v1485 = vpop.f32.mrb[0].mxu0
      %v1486 = vadd.f32 0.0, %v1485
      %v1487 = vpop.f32.mrb[0].mxu0
      %v1488 = vadd.f32 0.0, %v1487
      %1489 = vmatprep.mubr.bf16.mxu0 %v380
      %1490 = vmatmul.mubr.bf16.gmra.mrb[0].mxu0 %v379
      %v1491 = vpop.f32.mrb[0].mxu0
      %v1492 = vadd.f32 0.0, %v1491
      %v1493 = vpop.f32.mrb[0].mxu0
      %v1494 = vadd.f32 0.0, %v1493
      %v1495 = vpop.f32.mrb[0].mxu0
      %v1496 = vpop.f32.mrb[0].mxu0
      %1497 = vdwg.mxu0
      %1498 = vmatprep.subr.bf16.mxu0 %v1009
      %1499 = vmatpush1.bf16.msra.mxu0 %v1008
      %1500 = vmatprep.subr.bf16.mxu0 0
      %1501 = vmatpush1.bf16.msra.mxu0 0
      %1502 = vmatprep.subr.bf16.mxu0 0
      %1503 = vmatpush1.bf16.msra.mxu0 0
      %1504 = vmatprep.subr.bf16.mxu0 0
      %1505 = vmatpush1.bf16.msra.mxu0 0
      %1506 = vmatprep.subr.bf16.mxu0 0
      %1507 = vmatpush1.bf16.msra.mxu0 0
      %1508 = vmatprep.subr.bf16.mxu0 0
      %1509 = vmatpush1.bf16.msra.mxu0 0
      %1510 = vmatprep.subr.bf16.mxu0 0
      %1511 = vmatpush1.bf16.msra.mxu0 0
      %1512 = vmatprep.subr.bf16.mxu0 0
      %1513 = vmatpush1.bf16.msra.mxu0 0
      %1514 = vmatprep.subr.bf16.mxu0 0
      %1515 = vmatpush1.bf16.msra.mxu0 0
      %1516 = vmatprep.subr.bf16.mxu0 0
      %1517 = vmatpush1.bf16.msra.mxu0 0
      %1518 = vmatprep.subr.bf16.mxu0 0
      %1519 = vmatpush1.bf16.msra.mxu0 0
      %1520 = vmatprep.subr.bf16.mxu0 0
      %1521 = vmatpush1.bf16.msra.mxu0 0
      %1522 = vmatprep.subr.bf16.mxu0 0
      %1523 = vmatpush1.bf16.msra.mxu0 0
      %1524 = vmatprep.subr.bf16.mxu0 0
      %1525 = vmatpush1.bf16.msra.mxu0 0
      %1526 = vmatprep.subr.bf16.mxu0 0
      %1527 = vmatpush1.bf16.msra.mxu0 0
      %1528 = vmatprep.subr.bf16.mxu0 0
      %1529 = vmatpush1.bf16.msra.mxu0 0
      %1530 = vmatprep.mubr.bf16.mxu0 0
      %1531 = vmatmul.mubr.bf16.gmra.mrb[0].mxu0 %v1132
      %v1532 = vpop.f32.mrb[0].mxu0
      %v1533 = vadd.f32 %v1462, %v1532
      %v1534 = vpop.f32.mrb[0].mxu0
      %v1535 = vadd.f32 %v1464, %v1534
      %v1536 = vpop.f32.mrb[0].mxu0
      %v1537 = vadd.f32 %v1466, %v1536
      %v1538 = vpop.f32.mrb[0].mxu0
      %v1539 = vadd.f32 %v1468, %v1538
      %1540 = vmatprep.mubr.bf16.mxu0 0
      %1541 = vmatmul.mubr.bf16.gmra.mrb[0].mxu0 %v1135
      %v1542 = vpop.f32.mrb[0].mxu0
      %v1543 = vadd.f32 %v1472, %v1542
      %v1544 = vpop.f32.mrb[0].mxu0
      %v1545 = vadd.f32 %v1474, %v1544
      %v1546 = vpop.f32.mrb[0].mxu0
      %v1547 = vadd.f32 %v1476, %v1546
      %v1548 = vpop.f32.mrb[0].mxu0
      %v1549 = vadd.f32 %v1478, %v1548
      %1550 = vmatprep.mubr.bf16.mxu0 0
      %1551 = vmatmul.mubr.bf16.gmra.mrb[0].mxu0 %v1138
      %v1552 = vpop.f32.mrb[0].mxu0
      %v1553 = vadd.f32 %v1482, %v1552
      %v1554 = vpop.f32.mrb[0].mxu0
      %v1555 = vadd.f32 %v1484, %v1554
      %v1556 = vpop.f32.mrb[0].mxu0
      %v1557 = vadd.f32 %v1486, %v1556
      %v1558 = vpop.f32.mrb[0].mxu0
      %v1559 = vadd.f32 %v1488, %v1558
      %1560 = vmatprep.mubr.bf16.mxu0 0
      %1561 = vmatmul.mubr.bf16.gmra.mrb[0].mxu0 %v1141
      %v1562 = vpop.f32.mrb[0].mxu0
      %v1563 = vadd.f32 %v1492, %v1562
      %v1564 = vpop.f32.mrb[0].mxu0
      %v1565 = vadd.f32 %v1494, %v1564
      %v1566 = vpop.f32.mrb[0].mxu0
      %v1567 = vpop.f32.mrb[0].mxu0
      %1568 = vdwg.mxu0
      %1569 = vmatprep.subr.bf16.mxu0 0
      %1570 = vmatpush1.bf16.msra.mxu0 %v898
      %1571 = vmatprep.subr.bf16.mxu0 0
      %1572 = vmatpush1.bf16.msra.mxu0 %v905
      %1573 = vmatprep.subr.bf16.mxu0 0
      %1574 = vmatpush1.bf16.msra.mxu0 %v912
      %1575 = vmatprep.subr.bf16.mxu0 0
      %1576 = vmatpush1.bf16.msra.mxu0 %v919
      %1577 = vmatprep.subr.bf16.mxu0 0
      %1578 = vmatpush1.bf16.msra.mxu0 %v926
      %1579 = vmatprep.subr.bf16.mxu0 0
      %1580 = vmatpush1.bf16.msra.mxu0 %v933
      %1581 = vmatprep.subr.bf16.mxu0 0
      %1582 = vmatpush1.bf16.msra.mxu0 %v940
      %1583 = vmatprep.subr.bf16.mxu0 0
      %1584 = vmatpush1.bf16.msra.mxu0 %v947
      %1585 = vmatprep.subr.bf16.mxu0 0
      %1586 = vmatpush1.bf16.msra.mxu0 %v954
      %1587 = vmatprep.subr.bf16.mxu0 0
      %1588 = vmatpush1.bf16.msra.mxu0 %v961
      %1589 = vmatprep.subr.bf16.mxu0 0
      %1590 = vmatpush1.bf16.msra.mxu0 %v968
      %1591 = vmatprep.subr.bf16.mxu0 0
      %1592 = vmatpush1.bf16.msra.mxu0 %v975
      %1593 = vmatprep.subr.bf16.mxu0 0
      %1594 = vmatpush1.bf16.msra.mxu0 %v982
      %1595 = vmatprep.subr.bf16.mxu0 0
      %1596 = vmatpush1.bf16.msra.mxu0 %v989
      %1597 = vmatprep.subr.bf16.mxu0 0
      %1598 = vmatpush1.bf16.msra.mxu0 %v996
      %1599 = vmatprep.subr.bf16.mxu0 0
      %1600 = vmatpush1.bf16.msra.mxu0 %v1003
      %1601 = vmatprep.mubr.bf16.mxu0 %v371
      %1602 = vmatmul.mubr.bf16.gmra.mrb[0].mxu0 %v370
      %v1603 = vpop.f32.mrb[0].mxu0
      %v1604 = vadd.f32 0.0, %v1603
      %v1605 = vpop.f32.mrb[0].mxu0
      %v1606 = vpop.f32.mrb[0].mxu0
      %v1607 = vadd.f32 0.0, %v1606
      %v1608 = vpop.f32.mrb[0].mxu0
      %1609 = vmatprep.mubr.bf16.mxu0 %v374
      %1610 = vmatmul.mubr.bf16.gmra.mrb[0].mxu0 %v373
      %v1611 = vpop.f32.mrb[0].mxu0
      %v1612 = vadd.f32 0.0, %v1611
      %v1613 = vpop.f32.mrb[0].mxu0
      %v1614 = vpop.f32.mrb[0].mxu0
      %v1615 = vadd.f32 0.0, %v1614
      %v1616 = vpop.f32.mrb[0].mxu0
      %1617 = vmatprep.mubr.bf16.mxu0 %v377
      %1618 = vmatmul.mubr.bf16.gmra.mrb[0].mxu0 %v376
      %v1619 = vpop.f32.mrb[0].mxu0
      %v1620 = vadd.f32 0.0, %v1619
      %v1621 = vpop.f32.mrb[0].mxu0
      %v1622 = vpop.f32.mrb[0].mxu0
      %v1623 = vadd.f32 0.0, %v1622
      %v1624 = vpop.f32.mrb[0].mxu0
      %1625 = vmatprep.mubr.bf16.mxu0 %v380
      %1626 = vmatmul.mubr.bf16.gmra.mrb[0].mxu0 %v379
      %v1627 = vpop.f32.mrb[0].mxu0
      %v1628 = vadd.f32 0.0, %v1627
      %v1629 = vpop.f32.mrb[0].mxu0
      %v1630 = vpop.f32.mrb[0].mxu0
      %v1631 = vpop.f32.mrb[0].mxu0
      %1632 = vdwg.mxu0
      %1633 = vmatprep.subr.bf16.mxu0 0
      %1634 = vmatpush1.bf16.msra.mxu0 %v1010
      %1635 = vmatprep.subr.bf16.mxu0 0
      %1636 = vmatpush1.bf16.msra.mxu0 0
      %1637 = vmatprep.subr.bf16.mxu0 0
      %1638 = vmatpush1.bf16.msra.mxu0 0
      %1639 = vmatprep.subr.bf16.mxu0 0
      %1640 = vmatpush1.bf16.msra.mxu0 0
      %1641 = vmatprep.subr.bf16.mxu0 0
      %1642 = vmatpush1.bf16.msra.mxu0 0
      %1643 = vmatprep.subr.bf16.mxu0 0
      %1644 = vmatpush1.bf16.msra.mxu0 0
      %1645 = vmatprep.subr.bf16.mxu0 0
      %1646 = vmatpush1.bf16.msra.mxu0 0
      %1647 = vmatprep.subr.bf16.mxu0 0
      %1648 = vmatpush1.bf16.msra.mxu0 0
      %1649 = vmatprep.subr.bf16.mxu0 0
      %1650 = vmatpush1.bf16.msra.mxu0 0
      %1651 = vmatprep.subr.bf16.mxu0 0
      %1652 = vmatpush1.bf16.msra.mxu0 0
      %1653 = vmatprep.subr.bf16.mxu0 0
      %1654 = vmatpush1.bf16.msra.mxu0 0
      %1655 = vmatprep.subr.bf16.mxu0 0
      %1656 = vmatpush1.bf16.msra.mxu0 0
      %1657 = vmatprep.subr.bf16.mxu0 0
      %1658 = vmatpush1.bf16.msra.mxu0 0
      %1659 = vmatprep.subr.bf16.mxu0 0
      %1660 = vmatpush1.bf16.msra.mxu0 0
      %1661 = vmatprep.subr.bf16.mxu0 0
      %1662 = vmatpush1.bf16.msra.mxu0 0
      %1663 = vmatprep.subr.bf16.mxu0 0
      %1664 = vmatpush1.bf16.msra.mxu0 0
      %1665 = vmatprep.mubr.bf16.mxu0 0
      %1666 = vmatmul.mubr.bf16.gmra.mrb[0].mxu0 %v1132
      %v1667 = vpop.f32.mrb[0].mxu0
      %v1668 = vadd.f32 %v1604, %v1667
      %v1669 = vpop.f32.mrb[0].mxu0
      %v1670 = vpop.f32.mrb[0].mxu0
      %v1671 = vadd.f32 %v1607, %v1670
      %v1672 = vpop.f32.mrb[0].mxu0
      %1673 = vmatprep.mubr.bf16.mxu0 0
      %1674 = vmatmul.mubr.bf16.gmra.mrb[0].mxu0 %v1135
      %v1675 = vpop.f32.mrb[0].mxu0
      %v1676 = vadd.f32 %v1612, %v1675
      %v1677 = vpop.f32.mrb[0].mxu0
      %v1678 = vpop.f32.mrb[0].mxu0
      %v1679 = vadd.f32 %v1615, %v1678
      %v1680 = vpop.f32.mrb[0].mxu0
      %1681 = vmatprep.mubr.bf16.mxu0 0
      %1682 = vmatmul.mubr.bf16.gmra.mrb[0].mxu0 %v1138
      %v1683 = vpop.f32.mrb[0].mxu0
      %v1684 = vadd.f32 %v1620, %v1683
      %v1685 = vpop.f32.mrb[0].mxu0
      %v1686 = vpop.f32.mrb[0].mxu0
      %v1687 = vadd.f32 %v1623, %v1686
      %v1688 = vpop.f32.mrb[0].mxu0
      %1689 = vmatprep.mubr.bf16.mxu0 0
      %1690 = vmatmul.mubr.bf16.gmra.mrb[0].mxu0 %v1141
      %v1691 = vpop.f32.mrb[0].mxu0
      %v1692 = vadd.f32 %v1628, %v1691
      %v1693 = vpop.f32.mrb[0].mxu0
      %v1694 = vpop.f32.mrb[0].mxu0
      %v1695 = vpop.f32.mrb[0].mxu0
      %1696 = vdwg.mxu0
      %1697 = vxpose.xlu0.b32.start [1/16] %v1249, 128
      %1698 = vxpose.xlu0.b32.cont [2/16] %v1253, 128
      %1699 = vxpose.xlu0.b32.cont [3/16] %v1259, 128
      %1700 = vxpose.xlu0.b32.cont [4/16] %v1263, 128
      %1701 = vxpose.xlu0.b32.cont [5/16] %v1269, 128
      %1702 = vxpose.xlu0.b32.cont [6/16] %v1273, 128
      %1703 = vxpose.xlu0.b32.cont [7/16] %v1279, 128
      %1704 = vxpose.xlu0.b32.cont [8/16] 0.0, 128
      %1705 = vxpose.xlu0.b32.cont [9/16] 0.0, 128
      %1706 = vxpose.xlu0.b32.cont [10/16] 0.0, 128
      %1707 = vxpose.xlu0.b32.cont [11/16] 0.0, 128
      %1708 = vxpose.xlu0.b32.cont [12/16] 0.0, 128
      %1709 = vxpose.xlu0.b32.cont [13/16] 0.0, 128
      %1710 = vxpose.xlu0.b32.cont [14/16] 0.0, 128
      %1711 = vxpose.xlu0.b32.cont [15/16] 0.0, 128
      %1712 = vxpose.xlu0.b32.end [16/16] 0.0, 128
      %v1713 = vpop.trf.xlu0
      %v1714 = vpop.trf.xlu0
      %v1715 = vpop.trf.xlu0
      %v1716 = vpop.trf.xlu0
      %v1717 = vpop.trf.xlu0
      %v1718 = vpop.trf.xlu0
      %v1719 = vpop.trf.xlu0
      %v1720 = vpop.trf.xlu0
      %v1721 = vpop.trf.xlu0
      %v1722 = vpop.trf.xlu0
      %v1723 = vpop.trf.xlu0
      %v1724 = vpop.trf.xlu0
      %v1725 = vpop.trf.xlu0
      %v1726 = vpop.trf.xlu0
      %v1727 = vpop.trf.xlu0
      %v1728 = vpop.trf.xlu0
      %1729 = vxpose.xlu0.b32.start [1/16] %v1251, 128
      %1730 = vxpose.xlu0.b32.cont [2/16] %v1255, 128
      %1731 = vxpose.xlu0.b32.cont [3/16] %v1261, 128
      %1732 = vxpose.xlu0.b32.cont [4/16] %v1265, 128
      %1733 = vxpose.xlu0.b32.cont [5/16] %v1271, 128
      %1734 = vxpose.xlu0.b32.cont [6/16] %v1275, 128
      %1735 = vxpose.xlu0.b32.cont [7/16] %v1281, 128
      %1736 = vxpose.xlu0.b32.cont [8/16] 0.0, 128
      %1737 = vxpose.xlu0.b32.cont [9/16] 0.0, 128
      %1738 = vxpose.xlu0.b32.cont [10/16] 0.0, 128
      %1739 = vxpose.xlu0.b32.cont [11/16] 0.0, 128
      %1740 = vxpose.xlu0.b32.cont [12/16] 0.0, 128
      %1741 = vxpose.xlu0.b32.cont [13/16] 0.0, 128
      %1742 = vxpose.xlu0.b32.cont [14/16] 0.0, 128
      %1743 = vxpose.xlu0.b32.cont [15/16] 0.0, 128
      %1744 = vxpose.xlu0.b32.end [16/16] 0.0, 128
      %v1745 = vpop.trf.xlu0
      %v1746 = vpop.trf.xlu0
      %v1747 = vpop.trf.xlu0
      %v1748 = vpop.trf.xlu0
      %v1749 = vpop.trf.xlu0
      %v1750 = vpop.trf.xlu0
      %v1751 = vpop.trf.xlu0
      %v1752 = vpop.trf.xlu0
      %v1753 = vpop.trf.xlu0
      %v1754 = vpop.trf.xlu0
      %v1755 = vpop.trf.xlu0
      %v1756 = vpop.trf.xlu0
      %v1757 = vpop.trf.xlu0
      %v1758 = vpop.trf.xlu0
      %v1759 = vpop.trf.xlu0
      %v1760 = vpop.trf.xlu0
      %1761 = vxpose.xlu0.b32.start [1/16] %v1391, 128
      %1762 = vxpose.xlu0.b32.cont [2/16] %v1395, 128
      %1763 = vxpose.xlu0.b32.cont [3/16] %v1401, 128
      %1764 = vxpose.xlu0.b32.cont [4/16] %v1405, 128
      %1765 = vxpose.xlu0.b32.cont [5/16] %v1411, 128
      %1766 = vxpose.xlu0.b32.cont [6/16] %v1415, 128
      %1767 = vxpose.xlu0.b32.cont [7/16] %v1421, 128
      %1768 = vxpose.xlu0.b32.cont [8/16] 0.0, 128
      %1769 = vxpose.xlu0.b32.cont [9/16] 0.0, 128
      %1770 = vxpose.xlu0.b32.cont [10/16] 0.0, 128
      %1771 = vxpose.xlu0.b32.cont [11/16] 0.0, 128
      %1772 = vxpose.xlu0.b32.cont [12/16] 0.0, 128
      %1773 = vxpose.xlu0.b32.cont [13/16] 0.0, 128
      %1774 = vxpose.xlu0.b32.cont [14/16] 0.0, 128
      %1775 = vxpose.xlu0.b32.cont [15/16] 0.0, 128
      %1776 = vxpose.xlu0.b32.end [16/16] 0.0, 128
      %v1777 = vpop.trf.xlu0
      %v1778 = vpop.trf.xlu0
      %v1779 = vpop.trf.xlu0
      %v1780 = vpop.trf.xlu0
      %v1781 = vpop.trf.xlu0
      %v1782 = vpop.trf.xlu0
      %v1783 = vpop.trf.xlu0
      %v1784 = vpop.trf.xlu0
      %v1785 = vpop.trf.xlu0
      %v1786 = vpop.trf.xlu0
      %v1787 = vpop.trf.xlu0
      %v1788 = vpop.trf.xlu0
      %v1789 = vpop.trf.xlu0
      %v1790 = vpop.trf.xlu0
      %v1791 = vpop.trf.xlu0
      %v1792 = vpop.trf.xlu0
      %1793 = vxpose.xlu0.b32.start [1/16] %v1393, 128
      %1794 = vxpose.xlu0.b32.cont [2/16] %v1397, 128
      %1795 = vxpose.xlu0.b32.cont [3/16] %v1403, 128
      %1796 = vxpose.xlu0.b32.cont [4/16] %v1407, 128
      %1797 = vxpose.xlu0.b32.cont [5/16] %v1413, 128
      %1798 = vxpose.xlu0.b32.cont [6/16] %v1417, 128
      %1799 = vxpose.xlu0.b32.cont [7/16] %v1423, 128
      %1800 = vxpose.xlu0.b32.cont [8/16] 0.0, 128
      %1801 = vxpose.xlu0.b32.cont [9/16] 0.0, 128
      %1802 = vxpose.xlu0.b32.cont [10/16] 0.0, 128
      %1803 = vxpose.xlu0.b32.cont [11/16] 0.0, 128
      %1804 = vxpose.xlu0.b32.cont [12/16] 0.0, 128
      %1805 = vxpose.xlu0.b32.cont [13/16] 0.0, 128
      %1806 = vxpose.xlu0.b32.cont [14/16] 0.0, 128
      %1807 = vxpose.xlu0.b32.cont [15/16] 0.0, 128
      %1808 = vxpose.xlu0.b32.end [16/16] 0.0, 128
      %v1809 = vpop.trf.xlu0
      %v1810 = vpop.trf.xlu0
      %v1811 = vpop.trf.xlu0
      %v1812 = vpop.trf.xlu0
      %v1813 = vpop.trf.xlu0
      %v1814 = vpop.trf.xlu0
      %v1815 = vpop.trf.xlu0
      %v1816 = vpop.trf.xlu0
      %v1817 = vpop.trf.xlu0
      %v1818 = vpop.trf.xlu0
      %v1819 = vpop.trf.xlu0
      %v1820 = vpop.trf.xlu0
      %v1821 = vpop.trf.xlu0
      %v1822 = vpop.trf.xlu0
      %v1823 = vpop.trf.xlu0
      %v1824 = vpop.trf.xlu0
      %1825 = vxpose.xlu0.b32.start [1/16] %v1533, 128
      %1826 = vxpose.xlu0.b32.cont [2/16] %v1537, 128
      %1827 = vxpose.xlu0.b32.cont [3/16] %v1543, 128
      %1828 = vxpose.xlu0.b32.cont [4/16] %v1547, 128
      %1829 = vxpose.xlu0.b32.cont [5/16] %v1553, 128
      %1830 = vxpose.xlu0.b32.cont [6/16] %v1557, 128
      %1831 = vxpose.xlu0.b32.cont [7/16] %v1563, 128
      %1832 = vxpose.xlu0.b32.cont [8/16] 0.0, 128
      %1833 = vxpose.xlu0.b32.cont [9/16] 0.0, 128
      %1834 = vxpose.xlu0.b32.cont [10/16] 0.0, 128
      %1835 = vxpose.xlu0.b32.cont [11/16] 0.0, 128
      %1836 = vxpose.xlu0.b32.cont [12/16] 0.0, 128
      %1837 = vxpose.xlu0.b32.cont [13/16] 0.0, 128
      %1838 = vxpose.xlu0.b32.cont [14/16] 0.0, 128
      %1839 = vxpose.xlu0.b32.cont [15/16] 0.0, 128
      %1840 = vxpose.xlu0.b32.end [16/16] 0.0, 128
      %v1841 = vpop.trf.xlu0
      %v1842 = vpop.trf.xlu0
      %v1843 = vpop.trf.xlu0
      %v1844 = vpop.trf.xlu0
      %v1845 = vpop.trf.xlu0
      %v1846 = vpop.trf.xlu0
      %v1847 = vpop.trf.xlu0
      %v1848 = vpop.trf.xlu0
      %v1849 = vpop.trf.xlu0
      %v1850 = vpop.trf.xlu0
      %v1851 = vpop.trf.xlu0
      %v1852 = vpop.trf.xlu0
      %v1853 = vpop.trf.xlu0
      %v1854 = vpop.trf.xlu0
      %v1855 = vpop.trf.xlu0
      %v1856 = vpop.trf.xlu0
      %1857 = vxpose.xlu0.b32.start [1/16] %v1535, 128
      %1858 = vxpose.xlu0.b32.cont [2/16] %v1539, 128
      %1859 = vxpose.xlu0.b32.cont [3/16] %v1545, 128
      %1860 = vxpose.xlu0.b32.cont [4/16] %v1549, 128
      %1861 = vxpose.xlu0.b32.cont [5/16] %v1555, 128
      %1862 = vxpose.xlu0.b32.cont [6/16] %v1559, 128
      %1863 = vxpose.xlu0.b32.cont [7/16] %v1565, 128
      %1864 = vxpose.xlu0.b32.cont [8/16] 0.0, 128
      %1865 = vxpose.xlu0.b32.cont [9/16] 0.0, 128
      %1866 = vxpose.xlu0.b32.cont [10/16] 0.0, 128
      %1867 = vxpose.xlu0.b32.cont [11/16] 0.0, 128
      %1868 = vxpose.xlu0.b32.cont [12/16] 0.0, 128
      %1869 = vxpose.xlu0.b32.cont [13/16] 0.0, 128
      %1870 = vxpose.xlu0.b32.cont [14/16] 0.0, 128
      %1871 = vxpose.xlu0.b32.cont [15/16] 0.0, 128
      %1872 = vxpose.xlu0.b32.end [16/16] 0.0, 128
      %v1873 = vpop.trf.xlu0
      %v1874 = vpop.trf.xlu0
      %v1875 = vpop.trf.xlu0
      %v1876 = vpop.trf.xlu0
      %v1877 = vpop.trf.xlu0
      %v1878 = vpop.trf.xlu0
      %v1879 = vpop.trf.xlu0
      %v1880 = vpop.trf.xlu0
      %v1881 = vpop.trf.xlu0
      %v1882 = vpop.trf.xlu0
      %v1883 = vpop.trf.xlu0
      %v1884 = vpop.trf.xlu0
      %v1885 = vpop.trf.xlu0
      %v1886 = vpop.trf.xlu0
      %v1887 = vpop.trf.xlu0
      %v1888 = vpop.trf.xlu0
      %1889 = vxpose.xlu0.b32.start [1/16] %v1668, 128
      %1890 = vxpose.xlu0.b32.cont [2/16] %v1671, 128
      %1891 = vxpose.xlu0.b32.cont [3/16] %v1676, 128
      %1892 = vxpose.xlu0.b32.cont [4/16] %v1679, 128
      %1893 = vxpose.xlu0.b32.cont [5/16] %v1684, 128
      %1894 = vxpose.xlu0.b32.cont [6/16] %v1687, 128
      %1895 = vxpose.xlu0.b32.cont [7/16] %v1692, 128
      %1896 = vxpose.xlu0.b32.cont [8/16] 0.0, 128
      %1897 = vxpose.xlu0.b32.cont [9/16] 0.0, 128
      %1898 = vxpose.xlu0.b32.cont [10/16] 0.0, 128
      %1899 = vxpose.xlu0.b32.cont [11/16] 0.0, 128
      %1900 = vxpose.xlu0.b32.cont [12/16] 0.0, 128
      %1901 = vxpose.xlu0.b32.cont [13/16] 0.0, 128
      %1902 = vxpose.xlu0.b32.cont [14/16] 0.0, 128
      %1903 = vxpose.xlu0.b32.cont [15/16] 0.0, 128
      %1904 = vxpose.xlu0.b32.end [16/16] 0.0, 128
      %v1905 = vpop.trf.xlu0
      %v1906 = vpop.trf.xlu0
      %v1907 = vpop.trf.xlu0
      %v1908 = vpop.trf.xlu0
      %v1909 = vpop.trf.xlu0
      %v1910 = vpop.trf.xlu0
      %v1911 = vpop.trf.xlu0
      %v1912 = vpop.trf.xlu0
      %v1913 = vpop.trf.xlu0
      %v1914 = vpop.trf.xlu0
      %v1915 = vpop.trf.xlu0
      %v1916 = vpop.trf.xlu0
      %v1917 = vpop.trf.xlu0
      %v1918 = vpop.trf.xlu0
      %v1919 = vpop.trf.xlu0
      %v1920 = vpop.trf.xlu0
      %vm1921 = vcmask 400384
      %1922 = vst.msk [vmem:[%s170] sm:$0xff] %vm1921, %v1713
      %1923 = vst.msk [vmem:[%s170 + $0x8] sm:$0xff] %vm1921, %v1714
      %1924 = vst.msk [vmem:[%s170 + $0x10] sm:$0xff] %vm1921, %v1715
      %1925 = vst.msk [vmem:[%s170 + $0x18] sm:$0xff] %vm1921, %v1716
      %1926 = vst.msk [vmem:[%s170 + $0x20] sm:$0xff] %vm1921, %v1717
      %1927 = vst.msk [vmem:[%s170 + $0x28] sm:$0xff] %vm1921, %v1718
      %1928 = vst.msk [vmem:[%s170 + $0x30] sm:$0xff] %vm1921, %v1719
      %1929 = vst.msk [vmem:[%s170 + $0x38] sm:$0xff] %vm1921, %v1720
      %1930 = vst.msk [vmem:[%s170 + $0x40] sm:$0xff] %vm1921, %v1721
      %1931 = vst.msk [vmem:[%s170 + $0x48] sm:$0xff] %vm1921, %v1722
      %1932 = vst.msk [vmem:[%s170 + $0x50] sm:$0xff] %vm1921, %v1723
      %1933 = vst.msk [vmem:[%s170 + $0x58] sm:$0xff] %vm1921, %v1724
      %1934 = vst.msk [vmem:[%s170 + $0x60] sm:$0xff] %vm1921, %v1725
      %1935 = vst.msk [vmem:[%s170 + $0x68] sm:$0xff] %vm1921, %v1726
      %1936 = vst.msk [vmem:[%s170 + $0x70] sm:$0xff] %vm1921, %v1727
      %1937 = vst.msk [vmem:[%s170 + $0x78] sm:$0xff] %vm1921, %v1728
      %1938 = vst.msk [vmem:[%s170 + $0x80] sm:$0xff] %vm1921, %v1745
      %1939 = vst.msk [vmem:[%s170 + $0x88] sm:$0xff] %vm1921, %v1746
      %1940 = vst.msk [vmem:[%s170 + $0x90] sm:$0xff] %vm1921, %v1747
      %1941 = vst.msk [vmem:[%s170 + $0x98] sm:$0xff] %vm1921, %v1748
      %1942 = vst.msk [vmem:[%s170 + $0xa0] sm:$0xff] %vm1921, %v1749
      %1943 = vst.msk [vmem:[%s170 + $0xa8] sm:$0xff] %vm1921, %v1750
      %1944 = vst.msk [vmem:[%s170 + $0xb0] sm:$0xff] %vm1921, %v1751
      %1945 = vst.msk [vmem:[%s170 + $0xb8] sm:$0xff] %vm1921, %v1752
      %1946 = vst.msk [vmem:[%s170 + $0xc0] sm:$0xff] %vm1921, %v1753
      %1947 = vst.msk [vmem:[%s170 + $0xc8] sm:$0xff] %vm1921, %v1754
      %1948 = vst.msk [vmem:[%s170 + $0xd0] sm:$0xff] %vm1921, %v1755
      %1949 = vst.msk [vmem:[%s170 + $0xd8] sm:$0xff] %vm1921, %v1756
      %1950 = vst.msk [vmem:[%s170 + $0xe0] sm:$0xff] %vm1921, %v1757
      %1951 = vst.msk [vmem:[%s170 + $0xe8] sm:$0xff] %vm1921, %v1758
      %1952 = vst.msk [vmem:[%s170 + $0xf0] sm:$0xff] %vm1921, %v1759
      %1953 = vst.msk [vmem:[%s170 + $0xf8] sm:$0xff] %vm1921, %v1760
      %1954 = vst.msk [vmem:[%s170 + $0x100] sm:$0xff] %vm1921, %v1777
      %1955 = vst.msk [vmem:[%s170 + $0x108] sm:$0xff] %vm1921, %v1778
      %1956 = vst.msk [vmem:[%s170 + $0x110] sm:$0xff] %vm1921, %v1779
      %1957 = vst.msk [vmem:[%s170 + $0x118] sm:$0xff] %vm1921, %v1780
      %1958 = vst.msk [vmem:[%s170 + $0x120] sm:$0xff] %vm1921, %v1781
      %1959 = vst.msk [vmem:[%s170 + $0x128] sm:$0xff] %vm1921, %v1782
      %1960 = vst.msk [vmem:[%s170 + $0x130] sm:$0xff] %vm1921, %v1783
      %1961 = vst.msk [vmem:[%s170 + $0x138] sm:$0xff] %vm1921, %v1784
      %1962 = vst.msk [vmem:[%s170 + $0x140] sm:$0xff] %vm1921, %v1785
      %1963 = vst.msk [vmem:[%s170 + $0x148] sm:$0xff] %vm1921, %v1786
      %1964 = vst.msk [vmem:[%s170 + $0x150] sm:$0xff] %vm1921, %v1787
      %1965 = vst.msk [vmem:[%s170 + $0x158] sm:$0xff] %vm1921, %v1788
      %1966 = vst.msk [vmem:[%s170 + $0x160] sm:$0xff] %vm1921, %v1789
      %1967 = vst.msk [vmem:[%s170 + $0x168] sm:$0xff] %vm1921, %v1790
      %1968 = vst.msk [vmem:[%s170 + $0x170] sm:$0xff] %vm1921, %v1791
      %1969 = vst.msk [vmem:[%s170 + $0x178] sm:$0xff] %vm1921, %v1792
      %1970 = vst.msk [vmem:[%s170 + $0x180] sm:$0xff] %vm1921, %v1809
      %1971 = vst.msk [vmem:[%s170 + $0x188] sm:$0xff] %vm1921, %v1810
      %1972 = vst.msk [vmem:[%s170 + $0x190] sm:$0xff] %vm1921, %v1811
      %1973 = vst.msk [vmem:[%s170 + $0x198] sm:$0xff] %vm1921, %v1812
      %1974 = vst.msk [vmem:[%s170 + $0x1a0] sm:$0xff] %vm1921, %v1813
      %1975 = vst.msk [vmem:[%s170 + $0x1a8] sm:$0xff] %vm1921, %v1814
      %1976 = vst.msk [vmem:[%s170 + $0x1b0] sm:$0xff] %vm1921, %v1815
      %1977 = vst.msk [vmem:[%s170 + $0x1b8] sm:$0xff] %vm1921, %v1816
      %1978 = vst.msk [vmem:[%s170 + $0x1c0] sm:$0xff] %vm1921, %v1817
      %1979 = vst.msk [vmem:[%s170 + $0x1c8] sm:$0xff] %vm1921, %v1818
      %1980 = vst.msk [vmem:[%s170 + $0x1d0] sm:$0xff] %vm1921, %v1819
      %1981 = vst.msk [vmem:[%s170 + $0x1d8] sm:$0xff] %vm1921, %v1820
      %1982 = vst.msk [vmem:[%s170 + $0x1e0] sm:$0xff] %vm1921, %v1821
      %1983 = vst.msk [vmem:[%s170 + $0x1e8] sm:$0xff] %vm1921, %v1822
      %1984 = vst.msk [vmem:[%s170 + $0x1f0] sm:$0xff] %vm1921, %v1823
      %1985 = vst.msk [vmem:[%s170 + $0x1f8] sm:$0xff] %vm1921, %v1824
      %1986 = vst.msk [vmem:[%s170 + $0x200] sm:$0xff] %vm1921, %v1841
      %1987 = vst.msk [vmem:[%s170 + $0x208] sm:$0xff] %vm1921, %v1842
      %1988 = vst.msk [vmem:[%s170 + $0x210] sm:$0xff] %vm1921, %v1843
      %1989 = vst.msk [vmem:[%s170 + $0x218] sm:$0xff] %vm1921, %v1844
      %1990 = vst.msk [vmem:[%s170 + $0x220] sm:$0xff] %vm1921, %v1845
      %1991 = vst.msk [vmem:[%s170 + $0x228] sm:$0xff] %vm1921, %v1846
      %1992 = vst.msk [vmem:[%s170 + $0x230] sm:$0xff] %vm1921, %v1847
      %1993 = vst.msk [vmem:[%s170 + $0x238] sm:$0xff] %vm1921, %v1848
      %1994 = vst.msk [vmem:[%s170 + $0x240] sm:$0xff] %vm1921, %v1849
      %1995 = vst.msk [vmem:[%s170 + $0x248] sm:$0xff] %vm1921, %v1850
      %1996 = vst.msk [vmem:[%s170 + $0x250] sm:$0xff] %vm1921, %v1851
      %1997 = vst.msk [vmem:[%s170 + $0x258] sm:$0xff] %vm1921, %v1852
      %1998 = vst.msk [vmem:[%s170 + $0x260] sm:$0xff] %vm1921, %v1853
      %1999 = vst.msk [vmem:[%s170 + $0x268] sm:$0xff] %vm1921, %v1854
      %2000 = vst.msk [vmem:[%s170 + $0x270] sm:$0xff] %vm1921, %v1855
      %2001 = vst.msk [vmem:[%s170 + $0x278] sm:$0xff] %vm1921, %v1856
      %2002 = vst.msk [vmem:[%s170 + $0x280] sm:$0xff] %vm1921, %v1873
      %2003 = vst.msk [vmem:[%s170 + $0x288] sm:$0xff] %vm1921, %v1874
      %2004 = vst.msk [vmem:[%s170 + $0x290] sm:$0xff] %vm1921, %v1875
      %2005 = vst.msk [vmem:[%s170 + $0x298] sm:$0xff] %vm1921, %v1876
      %2006 = vst.msk [vmem:[%s170 + $0x2a0] sm:$0xff] %vm1921, %v1877
      %2007 = vst.msk [vmem:[%s170 + $0x2a8] sm:$0xff] %vm1921, %v1878
      %2008 = vst.msk [vmem:[%s170 + $0x2b0] sm:$0xff] %vm1921, %v1879
      %2009 = vst.msk [vmem:[%s170 + $0x2b8] sm:$0xff] %vm1921, %v1880
      %2010 = vst.msk [vmem:[%s170 + $0x2c0] sm:$0xff] %vm1921, %v1881
      %2011 = vst.msk [vmem:[%s170 + $0x2c8] sm:$0xff] %vm1921, %v1882
      %2012 = vst.msk [vmem:[%s170 + $0x2d0] sm:$0xff] %vm1921, %v1883
      %2013 = vst.msk [vmem:[%s170 + $0x2d8] sm:$0xff] %vm1921, %v1884
      %2014 = vst.msk [vmem:[%s170 + $0x2e0] sm:$0xff] %vm1921, %v1885
      %2015 = vst.msk [vmem:[%s170 + $0x2e8] sm:$0xff] %vm1921, %v1886
      %2016 = vst.msk [vmem:[%s170 + $0x2f0] sm:$0xff] %vm1921, %v1887
      %2017 = vst.msk [vmem:[%s170 + $0x2f8] sm:$0xff] %vm1921, %v1888
      %2018 = vst.msk [vmem:[%s170 + $0x300] sm:$0xff] %vm1921, %v1905
      %2019 = vst.msk [vmem:[%s170 + $0x308] sm:$0xff] %vm1921, %v1906
      %2020 = vst.msk [vmem:[%s170 + $0x310] sm:$0xff] %vm1921, %v1907
      %2021 = vst.msk [vmem:[%s170 + $0x318] sm:$0xff] %vm1921, %v1908
      %2022 = vst.msk [vmem:[%s170 + $0x320] sm:$0xff] %vm1921, %v1909
      %2023 = vst.msk [vmem:[%s170 + $0x328] sm:$0xff] %vm1921, %v1910
      %p2024 = scmp.lt.s32.totalorder %s14, 1
      %s2025 = scalar_select %p2024, %s14, 1
      %s2026 = smul.addr %s2025, 102
      %s2027 = smul.addr %s2026, 8
      %s2028 = scalar_lea.vmem %s3, %s2027
      // Predicated region
      $region33: #{fwd.1} parent=31 // pred_check
        %p2029 = pneg %p100
      $region34: #{fwd.1} parent=31 // pred_check_branch
        %2031 = sbr.rel (%p2029) target = $region36
      $region35: #{fwd.1} parent=31 // pred_region
        _
      $region36: #{fwd.1} parent=31 // pred_fallthru
        _
    $region32: #{fwd.1} parent=5 // pred_fallthru
      _
    %p2032 = scmp.le.s32.totalorder 2, %s9
    // Predicated region
    $region37: #{fwd.1} parent=5 // pred_check
      %p2033 = pneg %p2032
    $region38: #{fwd.1} parent=5 // pred_check_branch
      %2035 = sbr.rel (%p2033) target = $region40
    $region39: #{fwd.1} parent=5 // pred_region
      %s2036 = ssub.s32 %s9, 2
      // Predicated region
      $region41: #{fwd.1} parent=39 // pred_check
        %p2037 = pneg %p106
      $region42: #{fwd.1} parent=39 // pred_check_branch
        %2039 = sbr.rel (%p2037) target = $region44
      $region43: #{fwd.1} parent=39 // pred_region
        %p2040 = scmp.lt.s32.totalorder %s15, 1
        %s2041 = scalar_select %p2040, %s15, 1
        %s2042 = smul.addr %s2041, 102
        %s2043 = smul.addr %s2042, 8
        %s2044 = scalar_lea.vmem %s3, %s2043
      $region44: #{fwd.1} parent=39 // pred_fallthru
        _
    $region40: #{fwd.1} parent=5 // pred_fallthru
      _
  $region6: #{fwd.1} parent=0 // loop_footer
    %s13 = sadd.s32 1, %s9
  $region7: #{fwd.1} parent=0 // loop_footer_branch
    %8 = sbr.rel target = $region3
  $region8: #{fwd.1} parent=0 // loop_exit
    _

</llo_original>
